<compile_context>
chip_gen: v6e
topology: v6e:2x2x1
jax: 0.10.0
libtpu: 0.0.40
codegen_flags: <defaults>
</compile_context>

<pallas_src>
import functools

import jax
import jax.numpy as jnp
from jax.experimental import pallas as pl
from jax.experimental.pallas import tpu as pltpu

EPS = 1e-5


def _round_up(x, m):
    return ((x + m - 1) // m) * m


# ---------------------------------------------------------------------------
# Pallas kernels
# ---------------------------------------------------------------------------
def _conv_core(xv, win_mask_ref, w_ref, y_ref, stats_ref, kbuf,
               *, offsets, store_off, cin_p):
    """Shared conv body: in-VMEM im2col -> one GEMM -> aligned store -> stats."""
    lwin = kbuf.shape[1]
    rows = y_ref.shape[1]

    # In-VMEM im2col: 9 lane-shifted taps, each a full (cin_p, lwin) slab
    # written at a sublane-aligned row offset k*cin_p (cin padded to the
    # sublane pack of the GEMM dtype).
    for k, off in enumerate(offsets):
        kbuf[pl.ds(k * cin_p, cin_p), :] = xv[:, off:off + lwin]

    # Single MXU GEMM, K = 9*cin_p, f32 accumulation.
    acc = jnp.dot(w_ref[...], kbuf[...], preferred_element_type=jnp.float32)

    # Lane-aligned output store: the zero prefix is one aligned memset (keeps
    # the buffer NaN-free for downstream masking), the acc store starts at a
    # 128-multiple lane offset -> unmasked, lane-dense vst.
    y_ref[0, :, :store_off] = jnp.zeros((rows, store_off), jnp.float32)
    y_ref[0, :, store_off:store_off + lwin] = acc

    # BatchNorm partial statistics over interior output positions, accumulated
    # across the batch grid in the resident (constant-index) stats block; it is
    # written back to HBM only once at the end of the grid.
    m = win_mask_ref[...]                                   # (1, lwin)
    am = acc * m
    part = jnp.concatenate(
        [jnp.sum(am, axis=1, keepdims=True),
         jnp.sum(am * acc, axis=1, keepdims=True)], axis=1)  # (rows, 2)

    @pl.when(pl.program_id(0) == 0)
    def _():
        stats_ref[...] = jnp.zeros_like(stats_ref)

    stats_ref[...] += part


def _conv1_kernel(x_ref, win_mask_ref, w_ref, y_ref, stats_ref, kbuf,
                  *, offsets, store_off, cin_p):
    """First conv: input is already zero-padded by the (single) wrapper pad,
    so taps are sliced straight from the input block (no pass-through copy)."""
    xv = x_ref[0].astype(kbuf.dtype)
    _conv_core(xv, win_mask_ref, w_ref, y_ref, stats_ref, kbuf,
               offsets=offsets, store_off=store_off, cin_p=cin_p)


def _conv2_kernel(x_ref, scale_ref, shift_ref, buf_mask_ref, win_mask_ref,
                  w_ref, y_ref, stats_ref, kbuf,
                  *, offsets, store_off, cin_p):
    """Second conv with BN1 + ReLU1 fused into its input path.  The interior
    mask restores the zero padding (and zeroes the pad channel rows, whose
    folded scale/shift are 0)."""
    x = x_ref[0]
    xv = (jnp.maximum(x * scale_ref[...] + shift_ref[...], 0.0)
          * buf_mask_ref[...]).astype(kbuf.dtype)
    _conv_core(xv, win_mask_ref, w_ref, y_ref, stats_ref, kbuf,
               offsets=offsets, store_off=store_off, cin_p=cin_p)


def _bn_relu_gather_kernel(y_ref, scale_ref, shift_ref, o_ref, *, row_starts, w):
    """Final folded BN2 + ReLU2 fused with the de-pad gather: reads the padded
    conv2 block, emits compact (Cout, H*W) interior-only output."""
    yv = y_ref[0]                                            # (Cout, lout2)
    g = jnp.concatenate([yv[:, rs:rs + w] for rs in row_starts], axis=1)
    o_ref[0] = jnp.maximum(g * scale_ref[...] + shift_ref[...], 0.0)


# ---------------------------------------------------------------------------
# Wrappers
# ---------------------------------------------------------------------------
def _conv_layer(xflat, wmat, win_mask, *, offsets, store_off, lwin, cin_p,
                gemm_dtype, pre_act=None):
    n, rows_in, lin = xflat.shape
    rows_out = wmat.shape[0]
    lout = store_off + lwin
    ktaps = len(offsets)

    in_arrays = [xflat]
    in_specs = [pl.BlockSpec((1, rows_in, lin), lambda i: (i, 0, 0))]
    if pre_act is None:
        kern = functools.partial(_conv1_kernel, offsets=offsets,
                                 store_off=store_off, cin_p=cin_p)
    else:
        scale, shift, buf_mask = pre_act
        kern = functools.partial(_conv2_kernel, offsets=offsets,
                                 store_off=store_off, cin_p=cin_p)
        in_arrays += [scale, shift, buf_mask]
        in_specs += [pl.BlockSpec((rows_in, 1), lambda i: (0, 0)),
                     pl.BlockSpec((rows_in, 1), lambda i: (0, 0)),
                     pl.BlockSpec((1, lin), lambda i: (0, 0))]
    in_arrays += [win_mask, wmat]
    in_specs += [pl.BlockSpec((1, lwin), lambda i: (0, 0)),
                 pl.BlockSpec((rows_out, ktaps * cin_p), lambda i: (0, 0))]

    return pl.pallas_call(
        kern,
        out_shape=(jax.ShapeDtypeStruct((n, rows_out, lout), jnp.float32),
                   jax.ShapeDtypeStruct((rows_out, 2), jnp.float32)),
        grid=(n,),
        in_specs=in_specs,
        out_specs=(pl.BlockSpec((1, rows_out, lout), lambda i: (i, 0, 0)),
                   pl.BlockSpec((rows_out, 2), lambda i: (0, 0))),
        scratch_shapes=[pltpu.VMEM((ktaps * cin_p, lwin), gemm_dtype)],
        compiler_params=pltpu.CompilerParams(
            # Batch axis must be "arbitrary": the stats output block is an
            # accumulator resident across the whole grid.
            dimension_semantics=("arbitrary",)),
    )(*in_arrays)


def _fold_bn(stats, gamma, beta, count, eps=EPS):
    """Fold training-mode BatchNorm (batch statistics) into per-channel
    scale/shift.  Zero-padded channel rows fold to scale=shift=0."""
    rows = stats.shape[0]
    g = jnp.pad(gamma.astype(jnp.float32), (0, rows - gamma.shape[0]))
    b = jnp.pad(beta.astype(jnp.float32), (0, rows - beta.shape[0]))
    mean = stats[:, 0] / count
    var = stats[:, 1] / count - mean * mean      # biased variance (PyTorch fwd)
    scale = g * jax.lax.rsqrt(var + eps)
    shift = b - mean * scale
    return scale.reshape(-1, 1), shift.reshape(-1, 1)


def _repack_weight(w_oihw, cout_p, cin_p, dtype):
    """OIHW -> (cout_p, 9*cin_p), tap-major / cin-minor, zero-padded channels."""
    co, ci, kh, kw = w_oihw.shape
    wpad = jnp.pad(w_oihw.astype(jnp.float32),
                   ((0, cout_p - co), (0, cin_p - ci), (0, 0), (0, 0)))
    return jnp.transpose(wpad, (0, 2, 3, 1)).reshape(
        cout_p, kh * kw * cin_p).astype(dtype)


def double_conv2d(x_nchw, params, *, gemm_dtype=jnp.bfloat16,
                  lane_multiple=128, eps=EPS):
    """Pallas implementation of DoubleConv2d.forward (bn='both', padding='same').

    gemm_dtype: MXU operand dtype (bf16 by default for v6e/v7x); accumulation
        and BN statistics stay f32.
    lane_multiple: lane rounding for compute windows / store offsets
        (use 256 on v6e/v7x to avoid partial trailing MXU passes).
    """
    x = x_nchw.astype(jnp.float32)
    n, cin, h, w = x.shape
    mid = params["w1"].shape[0]
    out_ch = params["w2"].shape[0]

    # Channel padding to the sublane pack of the GEMM dtype (8 f32 / 16 bf16).
    pack = 8 * (4 // jnp.dtype(gemm_dtype).itemsize)
    cin_p = _round_up(cin, pack)
    mid_p = _round_up(mid, pack)

    hp, wp = h + 2, w + 2
    off0 = wp + 1                       # tap-index -> output-index shift
    max_off = 2 * wp + 2                # largest 3x3 tap offset
    offsets = tuple(kh * wp + kw for kh in range(3) for kw in range(3))

    # Lane-aligned store offset: padded-grid position p lives at buffer
    # position p + shift in every conv OUTPUT buffer.
    store_off = _round_up(off0, lane_multiple)
    shift = store_off - off0
    offsets2 = tuple(t + shift for t in offsets)     # conv2 taps on that layout

    # Compute-window / buffer lengths (lane-dense multiples of lane_multiple).
    lwin2 = _round_up((h - 1) * wp + w, lane_multiple)   # covers all interior outs
    lout2 = store_off + lwin2
    lwin1 = _round_up(lwin2 + off0, lane_multiple)       # conv2 taps read off0 past
    lout1 = store_off + lwin1
    # conv1 taps read up to max_off past its window; extend H so ONE jnp.pad
    # (channels + halo + tail rows) builds the whole flat input buffer.
    hp_ext = -(-(lwin1 + max_off) // wp)
    lin1 = hp_ext * wp

    xflat = jnp.pad(x, ((0, 0), (0, cin_p - cin),
                        (1, hp_ext - h - 1), (1, 1))).reshape(n, cin_p, lin1)

    # Interior-position masks (p = index - sh is the padded-grid position).
    def interior(length, sh):
        p = jnp.arange(length) - sh
        r, c = p // wp, p % wp
        m = (p >= 0) & (r >= 1) & (r <= h) & (c >= 1) & (c <= w)
        return m.astype(jnp.float32).reshape(1, length)

    win_mask1 = interior(lwin1, -off0)   # conv1 output-window interior mask
    win_mask2 = interior(lwin2, -off0)   # conv2 output-window interior mask
    buf_mask2 = interior(lout1, shift)   # conv2 INPUT-buffer interior mask

    w1m = _repack_weight(params["w1"], mid_p, cin_p, gemm_dtype)
    w2m = _repack_weight(params["w2"], out_ch, mid_p, gemm_dtype)

    # Layer 1: conv1 + BN1 batch statistics (accumulated in-kernel over N).
    y1, st1 = _conv_layer(xflat, w1m, win_mask1, offsets=offsets,
                          store_off=store_off, lwin=lwin1, cin_p=cin_p,
                          gemm_dtype=gemm_dtype)
    s1, b1 = _fold_bn(st1, params["g1"], params["be1"], n * h * w, eps)

    # Layer 2: BN1 + ReLU1 fused into conv2's input path, conv2 + BN2 stats.
    y2, st2 = _conv_layer(y1, w2m, win_mask2, offsets=offsets2,
                          store_off=store_off, lwin=lwin2, cin_p=mid_p,
                          gemm_dtype=gemm_dtype, pre_act=(s1, b1, buf_mask2))
    s2, b2 = _fold_bn(st2, params["g2"], params["be2"], n * h * w, eps)

    # Final BN2 + ReLU2 fused with the interior gather -> compact (N, C, H*W).
    row_starts = tuple(shift + (r + 1) * wp + 1 for r in range(h))
    out_flat = pl.pallas_call(
        functools.partial(_bn_relu_gather_kernel, row_starts=row_starts, w=w),
        out_shape=jax.ShapeDtypeStruct((n, out_ch, h * w), jnp.float32),
        grid=(n,),
        in_specs=[
            pl.BlockSpec((1, out_ch, lout2), lambda i: (i, 0, 0)),
            pl.BlockSpec((out_ch, 1), lambda i: (0, 0)),
            pl.BlockSpec((out_ch, 1), lambda i: (0, 0)),
        ],
        out_specs=pl.BlockSpec((1, out_ch, h * w), lambda i: (i, 0, 0)),
        compiler_params=pltpu.CompilerParams(
            dimension_semantics=("parallel",)),
    )(y2, s2, b2)

    # Free (contiguous) metadata reshape -- no extra HBM pass.
    return out_flat.reshape(n, out_ch, h, w)


# ---------------------------------------------------------------------------
# Pure-JAX reference for verification (faithful to the PyTorch module).
# ---------------------------------------------------------------------------
def _ref_forward(x_nchw, params, eps=EPS):
    def conv(x, wgt, b):
        y = jax.lax.conv_general_dilated(
            x, wgt, window_strides=(1, 1), padding="SAME",
            dimension_numbers=("NCHW", "OIHW", "NCHW"))
        return y + b.reshape(1, -1, 1, 1)

    def bn(x, g, be):
        m = jnp.mean(x, axis=(0, 2, 3), keepdims=True)
        v = jnp.var(x, axis=(0, 2, 3), keepdims=True)
        return (x - m) / jnp.sqrt(v + eps) * g.reshape(1, -1, 1, 1) \
            + be.reshape(1, -1, 1, 1)

    y = jax.nn.relu(bn(conv(x_nchw, params["w1"], params["b1"]),
                       params["g1"], params["be1"]))
    y = jax.nn.relu(bn(conv(y, params["w2"], params["b2"]),
                       params["g2"], params["be2"]))
    return y


# ---------------------------------------------------------------------------
if __name__ == "__main__":
    N, IN_CH, H, W = 2, 4, 16, 16
    MID_CH = 8   # mid_ch defaults to out_ch
    OUT_CH = 8

    key = jax.random.PRNGKey(0)
    keys = jax.random.split(key, 9)

    params = {
        # conv1: Conv2d(in_ch, mid_ch, 3)
        "w1": 0.1 * jax.random.normal(keys[0], (MID_CH, IN_CH, 3, 3), jnp.float32),
        "b1": 0.1 * jax.random.normal(keys[1], (MID_CH,), jnp.float32),
        # BatchNorm2d(mid_ch) affine params
        "g1": 1.0 + 0.1 * jax.random.normal(keys[2], (MID_CH,), jnp.float32),
        "be1": 0.1 * jax.random.normal(keys[3], (MID_CH,), jnp.float32),
        # conv2: Conv2d(mid_ch, out_ch, 3)
        "w2": 0.1 * jax.random.normal(keys[4], (OUT_CH, MID_CH, 3, 3), jnp.float32),
        "b2": 0.1 * jax.random.normal(keys[5], (OUT_CH,), jnp.float32),
        # BatchNorm2d(out_ch) affine params
        "g2": 1.0 + 0.1 * jax.random.normal(keys[6], (OUT_CH,), jnp.float32),
        "be2": 0.1 * jax.random.normal(keys[7], (OUT_CH,), jnp.float32),
    }

    x = jax.random.normal(keys[8], (N, IN_CH, H, W), jnp.float32)

    ref = jax.block_until_ready(_ref_forward(x, params))

    # f32 GEMM path: tight check of the kernel structure / BN statistics.
    out_f32 = jax.block_until_ready(
        jax.jit(functools.partial(double_conv2d, gemm_dtype=jnp.float32))(
            x, params))
    assert out_f32.shape == (N, OUT_CH, H, W), out_f32.shape
    assert jnp.allclose(out_f32, ref, atol=1e-3, rtol=1e-3), (
        float(jnp.max(jnp.abs(out_f32 - ref))))

    # bf16 GEMM path (default; MXU-native on v6e/v7x): f32 accumulation, so
    # only operand-rounding error remains -> looser tolerance vs f32 reference.
    out_bf16 = jax.block_until_ready(jax.jit(double_conv2d)(x, params))
    assert out_bf16.shape == (N, OUT_CH, H, W), out_bf16.shape
    assert jnp.allclose(out_bf16, ref, atol=5e-2, rtol=5e-2), (
        float(jnp.max(jnp.abs(out_bf16 - ref))))

    print("KERNEL_OK")
</pallas_src>

<mosaic_0001>
module attributes {stable_mosaic.version = 11 : i64} {
  func.func @_conv1_kernel(%arg0: i32, %arg1: memref<1x8x558xf32, #tpu.memory_space<vmem>>, %arg2: memref<1x512xf32, #tpu.memory_space<vmem>>, %arg3: memref<8x72xf32, #tpu.memory_space<vmem>>, %arg4: memref<1x8x640xf32, #tpu.memory_space<vmem>>, %arg5: memref<8x2xf32, #tpu.memory_space<vmem>>, %arg6: memref<72x512xf32, #tpu.memory_space<vmem>>) attributes {dimension_semantics = [#tpu.dimension_semantics<arbitrary>], iteration_bounds = array<i64: 2>, scalar_prefetch = 0 : i64, scratch_operands = 1 : i64, tpu.core_type = #tpu.core_type<tc>, window_params = [{transform_indices = @transform_0, window_bounds = array<i64: 1, 8, 558>}, {pipeline_mode = #tpu.pipeline_mode<synchronous>, transform_indices = @transform_1, window_bounds = array<i64: 1, 512>}, {pipeline_mode = #tpu.pipeline_mode<synchronous>, transform_indices = @transform_2, window_bounds = array<i64: 8, 72>}, {transform_indices = @transform_3, window_bounds = array<i64: 1, 8, 640>}, {pipeline_mode = #tpu.pipeline_mode<synchronous>, transform_indices = @transform_4, window_bounds = array<i64: 8, 2>}]} {
    %c0 = arith.constant 0 : index
    %c0_0 = arith.constant 0 : index
    %c0_1 = arith.constant 0 : index
    %0 = vector.load %arg1[%c0, %c0_0, %c0_1] : memref<1x8x558xf32, #tpu.memory_space<vmem>>, vector<1x8x558xf32>
    %1 = vector.shape_cast %0 : vector<1x8x558xf32> to vector<8x558xf32>
    %2 = vector.extract_strided_slice %1 {offsets = [0, 0], sizes = [8, 512], strides = [1, 1]} : vector<8x558xf32> to vector<8x512xf32>
    %c0_2 = arith.constant 0 : index
    %c0_3 = arith.constant 0 : index
    %3 = vector.load %arg6[%c0_2, %c0_3] : memref<72x512xf32, #tpu.memory_space<vmem>>, vector<8x512xf32>
    tpu.vector_store %arg6[%c0_2, %c0_3], %2 {strides = array<i32>} : memref<72x512xf32, #tpu.memory_space<vmem>>, vector<8x512xf32>,
    %4 = vector.extract_strided_slice %1 {offsets = [0, 1], sizes = [8, 512], strides = [1, 1]} : vector<8x558xf32> to vector<8x512xf32>
    %c8 = arith.constant 8 : index
    %c0_4 = arith.constant 0 : index
    %5 = vector.load %arg6[%c8, %c0_4] : memref<72x512xf32, #tpu.memory_space<vmem>>, vector<8x512xf32>
    tpu.vector_store %arg6[%c8, %c0_4], %4 {strides = array<i32>} : memref<72x512xf32, #tpu.memory_space<vmem>>, vector<8x512xf32>,
    %6 = vector.extract_strided_slice %1 {offsets = [0, 2], sizes = [8, 512], strides = [1, 1]} : vector<8x558xf32> to vector<8x512xf32>
    %c16 = arith.constant 16 : index
    %c0_5 = arith.constant 0 : index
    %7 = vector.load %arg6[%c16, %c0_5] : memref<72x512xf32, #tpu.memory_space<vmem>>, vector<8x512xf32>
    tpu.vector_store %arg6[%c16, %c0_5], %6 {strides = array<i32>} : memref<72x512xf32, #tpu.memory_space<vmem>>, vector<8x512xf32>,
    %8 = vector.extract_strided_slice %1 {offsets = [0, 18], sizes = [8, 512], strides = [1, 1]} : vector<8x558xf32> to vector<8x512xf32>
    %c24 = arith.constant 24 : index
    %c0_6 = arith.constant 0 : index
    %9 = vector.load %arg6[%c24, %c0_6] : memref<72x512xf32, #tpu.memory_space<vmem>>, vector<8x512xf32>
    tpu.vector_store %arg6[%c24, %c0_6], %8 {strides = array<i32>} : memref<72x512xf32, #tpu.memory_space<vmem>>, vector<8x512xf32>,
    %10 = vector.extract_strided_slice %1 {offsets = [0, 19], sizes = [8, 512], strides = [1, 1]} : vector<8x558xf32> to vector<8x512xf32>
    %c32 = arith.constant 32 : index
    %c0_7 = arith.constant 0 : index
    %11 = vector.load %arg6[%c32, %c0_7] : memref<72x512xf32, #tpu.memory_space<vmem>>, vector<8x512xf32>
    tpu.vector_store %arg6[%c32, %c0_7], %10 {strides = array<i32>} : memref<72x512xf32, #tpu.memory_space<vmem>>, vector<8x512xf32>,
    %12 = vector.extract_strided_slice %1 {offsets = [0, 20], sizes = [8, 512], strides = [1, 1]} : vector<8x558xf32> to vector<8x512xf32>
    %c40 = arith.constant 40 : index
    %c0_8 = arith.constant 0 : index
    %13 = vector.load %arg6[%c40, %c0_8] : memref<72x512xf32, #tpu.memory_space<vmem>>, vector<8x512xf32>
    tpu.vector_store %arg6[%c40, %c0_8], %12 {strides = array<i32>} : memref<72x512xf32, #tpu.memory_space<vmem>>, vector<8x512xf32>,
    %14 = vector.extract_strided_slice %1 {offsets = [0, 36], sizes = [8, 512], strides = [1, 1]} : vector<8x558xf32> to vector<8x512xf32>
    %c48 = arith.constant 48 : index
    %c0_9 = arith.constant 0 : index
    %15 = vector.load %arg6[%c48, %c0_9] : memref<72x512xf32, #tpu.memory_space<vmem>>, vector<8x512xf32>
    tpu.vector_store %arg6[%c48, %c0_9], %14 {strides = array<i32>} : memref<72x512xf32, #tpu.memory_space<vmem>>, vector<8x512xf32>,
    %16 = vector.extract_strided_slice %1 {offsets = [0, 37], sizes = [8, 512], strides = [1, 1]} : vector<8x558xf32> to vector<8x512xf32>
    %c56 = arith.constant 56 : index
    %c0_10 = arith.constant 0 : index
    %17 = vector.load %arg6[%c56, %c0_10] : memref<72x512xf32, #tpu.memory_space<vmem>>, vector<8x512xf32>
    tpu.vector_store %arg6[%c56, %c0_10], %16 {strides = array<i32>} : memref<72x512xf32, #tpu.memory_space<vmem>>, vector<8x512xf32>,
    %18 = vector.extract_strided_slice %1 {offsets = [0, 38], sizes = [8, 512], strides = [1, 1]} : vector<8x558xf32> to vector<8x512xf32>
    %c64 = arith.constant 64 : index
    %c0_11 = arith.constant 0 : index
    %19 = vector.load %arg6[%c64, %c0_11] : memref<72x512xf32, #tpu.memory_space<vmem>>, vector<8x512xf32>
    tpu.vector_store %arg6[%c64, %c0_11], %18 {strides = array<i32>} : memref<72x512xf32, #tpu.memory_space<vmem>>, vector<8x512xf32>,
    %c0_12 = arith.constant 0 : index
    %c0_13 = arith.constant 0 : index
    %20 = vector.load %arg3[%c0_12, %c0_13] : memref<8x72xf32, #tpu.memory_space<vmem>>, vector<8x72xf32>
    %c0_14 = arith.constant 0 : index
    %c0_15 = arith.constant 0 : index
    %21 = vector.load %arg6[%c0_14, %c0_15] : memref<72x512xf32, #tpu.memory_space<vmem>>, vector<72x512xf32>
    %cst = arith.constant dense<0.000000e+00> : vector<8x512xf32>
    %22 = tpu.matmul %20, %21, %cst {dimension_numbers = #tpu.dot_dimension_numbers<[1], [0], [0], [1], [0, 0, 1, 1], [], []>} : vector<8x72xf32>, vector<72x512xf32>, vector<8x512xf32> -> vector<8x512xf32>
    %cst_16 = arith.constant 0.000000e+00 : f32
    %23 = vector.broadcast %cst_16 : f32 to vector<8x128xf32>
    %c0_17 = arith.constant 0 : index
    %c0_18 = arith.constant 0 : index
    %c0_19 = arith.constant 0 : index
    %24 = vector.load %arg4[%c0_17, %c0_18, %c0_19] : memref<1x8x640xf32, #tpu.memory_space<vmem>>, vector<1x8x128xf32>
    %25 = vector.shape_cast %24 : vector<1x8x128xf32> to vector<8x128xf32>
    %26 = vector.shape_cast %23 : vector<8x128xf32> to vector<1x8x128xf32>
    tpu.vector_store %arg4[%c0_17, %c0_18, %c0_19], %26 {strides = array<i32>} : memref<1x8x640xf32, #tpu.memory_space<vmem>>, vector<1x8x128xf32>,
    %c0_20 = arith.constant 0 : index
    %c0_21 = arith.constant 0 : index
    %c128 = arith.constant 128 : index
    %27 = vector.load %arg4[%c0_20, %c0_21, %c128] : memref<1x8x640xf32, #tpu.memory_space<vmem>>, vector<1x8x512xf32>
    %28 = vector.shape_cast %27 : vector<1x8x512xf32> to vector<8x512xf32>
    %29 = vector.shape_cast %22 : vector<8x512xf32> to vector<1x8x512xf32>
    tpu.vector_store %arg4[%c0_20, %c0_21, %c128], %29 {strides = array<i32>} : memref<1x8x640xf32, #tpu.memory_space<vmem>>, vector<1x8x512xf32>,
    %c0_22 = arith.constant 0 : index
    %c0_23 = arith.constant 0 : index
    %30 = vector.load %arg2[%c0_22, %c0_23] : memref<1x512xf32, #tpu.memory_space<vmem>>, vector<1x512xf32>
    %31 = vector.broadcast %30 : vector<1x512xf32> to vector<8x512xf32>
    %32 = arith.mulf %22, %31 : vector<8x512xf32>
    %cst_24 = arith.constant dense<0.000000e+00> : vector<8xf32>
    %33 = vector.multi_reduction <add>, %32, %cst_24 [1] : vector<8x512xf32> to vector<8xf32>
    %34 = vector.shape_cast %33 : vector<8xf32> to vector<8x1xf32>
    %35 = arith.mulf %32, %22 : vector<8x512xf32>
    %cst_25 = arith.constant dense<0.000000e+00> : vector<8xf32>
    %36 = vector.multi_reduction <add>, %35, %cst_25 [1] : vector<8x512xf32> to vector<8xf32>
    %37 = vector.shape_cast %36 : vector<8xf32> to vector<8x1xf32>
    %38 = tpu.concatenate %34, %37 in 1 : vector<8x1xf32>, vector<8x1xf32> -> vector<8x2xf32>
    %c0_i32 = arith.constant 0 : i32
    %39 = arith.cmpi eq, %arg0, %c0_i32 : i32
    %40 = arith.extui %39 : i1 to i32
    %c0_i32_26 = arith.constant 0 : i32
    %41 = arith.cmpi ne, %40, %c0_i32_26 : i32
    scf.if %41 {
      %cst_31 = arith.constant 0.000000e+00 : f32
      %45 = vector.broadcast %cst_31 : f32 to vector<8x2xf32>
      %c0_32 = arith.constant 0 : index
      %c0_33 = arith.constant 0 : index
      %46 = vector.load %arg5[%c0_32, %c0_33] : memref<8x2xf32, #tpu.memory_space<vmem>>, vector<8x2xf32>
      tpu.vector_store %arg5[%c0_32, %c0_33], %45 {strides = array<i32>} : memref<8x2xf32, #tpu.memory_space<vmem>>, vector<8x2xf32>,
    } else {
    }
    %c0_27 = arith.constant 0 : index
    %c0_28 = arith.constant 0 : index
    %42 = vector.load %arg5[%c0_27, %c0_28] : memref<8x2xf32, #tpu.memory_space<vmem>>, vector<8x2xf32>
    %43 = arith.addf %42, %38 : vector<8x2xf32>
    %c0_29 = arith.constant 0 : index
    %c0_30 = arith.constant 0 : index
    %44 = vector.load %arg5[%c0_29, %c0_30] : memref<8x2xf32, #tpu.memory_space<vmem>>, vector<8x2xf32>
    tpu.vector_store %arg5[%c0_29, %c0_30], %43 {strides = array<i32>} : memref<8x2xf32, #tpu.memory_space<vmem>>, vector<8x2xf32>,
    return
  }
  func.func @transform_0(%arg0: i32) -> (i32, i32, i32) {
    %c0_i32 = arith.constant 0 : i32
    %c0_i32_0 = arith.constant 0 : i32
    %c0_i32_1 = arith.constant 0 : i32
    return %arg0, %c0_i32, %c0_i32_0 : i32, i32, i32
  }
  func.func @transform_1(%arg0: i32) -> (i32, i32) {
    %c0_i32 = arith.constant 0 : i32
    %c0_i32_0 = arith.constant 0 : i32
    %c0_i32_1 = arith.constant 0 : i32
    return %c0_i32, %c0_i32_0 : i32, i32
  }
  func.func @transform_2(%arg0: i32) -> (i32, i32) {
    %c0_i32 = arith.constant 0 : i32
    %c0_i32_0 = arith.constant 0 : i32
    %c0_i32_1 = arith.constant 0 : i32
    return %c0_i32, %c0_i32_0 : i32, i32
  }
  func.func @transform_3(%arg0: i32) -> (i32, i32, i32) {
    %c0_i32 = arith.constant 0 : i32
    %c0_i32_0 = arith.constant 0 : i32
    %c0_i32_1 = arith.constant 0 : i32
    return %arg0, %c0_i32, %c0_i32_0 : i32, i32, i32
  }
  func.func @transform_4(%arg0: i32) -> (i32, i32) {
    %c0_i32 = arith.constant 0 : i32
    %c0_i32_0 = arith.constant 0 : i32
    %c0_i32_1 = arith.constant 0 : i32
    return %c0_i32, %c0_i32_0 : i32, i32
  }
}

module attributes {stable_mosaic.version = 11 : i64} {
  func.func @_conv2_kernel(%arg0: i32, %arg1: memref<1x8x640xf32, #tpu.memory_space<vmem>>, %arg2: memref<8x1xf32, #tpu.memory_space<vmem>>, %arg3: memref<8x1xf32, #tpu.memory_space<vmem>>, %arg4: memref<1x640xf32, #tpu.memory_space<vmem>>, %arg5: memref<1x384xf32, #tpu.memory_space<vmem>>, %arg6: memref<8x72xf32, #tpu.memory_space<vmem>>, %arg7: memref<1x8x512xf32, #tpu.memory_space<vmem>>, %arg8: memref<8x2xf32, #tpu.memory_space<vmem>>, %arg9: memref<72x384xf32, #tpu.memory_space<vmem>>) attributes {dimension_semantics = [#tpu.dimension_semantics<arbitrary>], iteration_bounds = array<i64: 2>, scalar_prefetch = 0 : i64, scratch_operands = 1 : i64, tpu.core_type = #tpu.core_type<tc>, window_params = [{transform_indices = @transform_0, window_bounds = array<i64: 1, 8, 640>}, {pipeline_mode = #tpu.pipeline_mode<synchronous>, transform_indices = @transform_1, window_bounds = array<i64: 8, 1>}, {pipeline_mode = #tpu.pipeline_mode<synchronous>, transform_indices = @transform_2, window_bounds = array<i64: 8, 1>}, {pipeline_mode = #tpu.pipeline_mode<synchronous>, transform_indices = @transform_3, window_bounds = array<i64: 1, 640>}, {pipeline_mode = #tpu.pipeline_mode<synchronous>, transform_indices = @transform_4, window_bounds = array<i64: 1, 384>}, {pipeline_mode = #tpu.pipeline_mode<synchronous>, transform_indices = @transform_5, window_bounds = array<i64: 8, 72>}, {transform_indices = @transform_6, window_bounds = array<i64: 1, 8, 512>}, {pipeline_mode = #tpu.pipeline_mode<synchronous>, transform_indices = @transform_7, window_bounds = array<i64: 8, 2>}]} {
    %c0 = arith.constant 0 : index
    %c0_0 = arith.constant 0 : index
    %c0_1 = arith.constant 0 : index
    %0 = vector.load %arg1[%c0, %c0_0, %c0_1] : memref<1x8x640xf32, #tpu.memory_space<vmem>>, vector<1x8x640xf32>
    %1 = vector.shape_cast %0 : vector<1x8x640xf32> to vector<8x640xf32>
    %c0_2 = arith.constant 0 : index
    %c0_3 = arith.constant 0 : index
    %2 = vector.load %arg2[%c0_2, %c0_3] : memref<8x1xf32, #tpu.memory_space<vmem>>, vector<8x1xf32>
    %3 = vector.broadcast %2 : vector<8x1xf32> to vector<8x640xf32>
    %4 = arith.mulf %1, %3 : vector<8x640xf32>
    %c0_4 = arith.constant 0 : index
    %c0_5 = arith.constant 0 : index
    %5 = vector.load %arg3[%c0_4, %c0_5] : memref<8x1xf32, #tpu.memory_space<vmem>>, vector<8x1xf32>
    %6 = vector.broadcast %5 : vector<8x1xf32> to vector<8x640xf32>
    %7 = arith.addf %4, %6 : vector<8x640xf32>
    %cst = arith.constant 0.000000e+00 : f32
    %8 = vector.broadcast %cst : f32 to vector<8x640xf32>
    %9 = arith.maximumf %7, %8 : vector<8x640xf32>
    %c0_6 = arith.constant 0 : index
    %c0_7 = arith.constant 0 : index
    %10 = vector.load %arg4[%c0_6, %c0_7] : memref<1x640xf32, #tpu.memory_space<vmem>>, vector<1x640xf32>
    %11 = vector.broadcast %10 : vector<1x640xf32> to vector<8x640xf32>
    %12 = arith.mulf %9, %11 : vector<8x640xf32>
    %13 = vector.extract_strided_slice %12 {offsets = [0, 109], sizes = [8, 384], strides = [1, 1]} : vector<8x640xf32> to vector<8x384xf32>
    %c0_8 = arith.constant 0 : index
    %c0_9 = arith.constant 0 : index
    %14 = vector.load %arg9[%c0_8, %c0_9] : memref<72x384xf32, #tpu.memory_space<vmem>>, vector<8x384xf32>
    tpu.vector_store %arg9[%c0_8, %c0_9], %13 {strides = array<i32>} : memref<72x384xf32, #tpu.memory_space<vmem>>, vector<8x384xf32>,
    %15 = vector.extract_strided_slice %12 {offsets = [0, 110], sizes = [8, 384], strides = [1, 1]} : vector<8x640xf32> to vector<8x384xf32>
    %c8 = arith.constant 8 : index
    %c0_10 = arith.constant 0 : index
    %16 = vector.load %arg9[%c8, %c0_10] : memref<72x384xf32, #tpu.memory_space<vmem>>, vector<8x384xf32>
    tpu.vector_store %arg9[%c8, %c0_10], %15 {strides = array<i32>} : memref<72x384xf32, #tpu.memory_space<vmem>>, vector<8x384xf32>,
    %17 = vector.extract_strided_slice %12 {offsets = [0, 111], sizes = [8, 384], strides = [1, 1]} : vector<8x640xf32> to vector<8x384xf32>
    %c16 = arith.constant 16 : index
    %c0_11 = arith.constant 0 : index
    %18 = vector.load %arg9[%c16, %c0_11] : memref<72x384xf32, #tpu.memory_space<vmem>>, vector<8x384xf32>
    tpu.vector_store %arg9[%c16, %c0_11], %17 {strides = array<i32>} : memref<72x384xf32, #tpu.memory_space<vmem>>, vector<8x384xf32>,
    %19 = vector.extract_strided_slice %12 {offsets = [0, 127], sizes = [8, 384], strides = [1, 1]} : vector<8x640xf32> to vector<8x384xf32>
    %c24 = arith.constant 24 : index
    %c0_12 = arith.constant 0 : index
    %20 = vector.load %arg9[%c24, %c0_12] : memref<72x384xf32, #tpu.memory_space<vmem>>, vector<8x384xf32>
    tpu.vector_store %arg9[%c24, %c0_12], %19 {strides = array<i32>} : memref<72x384xf32, #tpu.memory_space<vmem>>, vector<8x384xf32>,
    %21 = vector.extract_strided_slice %12 {offsets = [0, 128], sizes = [8, 384], strides = [1, 1]} : vector<8x640xf32> to vector<8x384xf32>
    %c32 = arith.constant 32 : index
    %c0_13 = arith.constant 0 : index
    %22 = vector.load %arg9[%c32, %c0_13] : memref<72x384xf32, #tpu.memory_space<vmem>>, vector<8x384xf32>
    tpu.vector_store %arg9[%c32, %c0_13], %21 {strides = array<i32>} : memref<72x384xf32, #tpu.memory_space<vmem>>, vector<8x384xf32>,
    %23 = vector.extract_strided_slice %12 {offsets = [0, 129], sizes = [8, 384], strides = [1, 1]} : vector<8x640xf32> to vector<8x384xf32>
    %c40 = arith.constant 40 : index
    %c0_14 = arith.constant 0 : index
    %24 = vector.load %arg9[%c40, %c0_14] : memref<72x384xf32, #tpu.memory_space<vmem>>, vector<8x384xf32>
    tpu.vector_store %arg9[%c40, %c0_14], %23 {strides = array<i32>} : memref<72x384xf32, #tpu.memory_space<vmem>>, vector<8x384xf32>,
    %25 = vector.extract_strided_slice %12 {offsets = [0, 145], sizes = [8, 384], strides = [1, 1]} : vector<8x640xf32> to vector<8x384xf32>
    %c48 = arith.constant 48 : index
    %c0_15 = arith.constant 0 : index
    %26 = vector.load %arg9[%c48, %c0_15] : memref<72x384xf32, #tpu.memory_space<vmem>>, vector<8x384xf32>
    tpu.vector_store %arg9[%c48, %c0_15], %25 {strides = array<i32>} : memref<72x384xf32, #tpu.memory_space<vmem>>, vector<8x384xf32>,
    %27 = vector.extract_strided_slice %12 {offsets = [0, 146], sizes = [8, 384], strides = [1, 1]} : vector<8x640xf32> to vector<8x384xf32>
    %c56 = arith.constant 56 : index
    %c0_16 = arith.constant 0 : index
    %28 = vector.load %arg9[%c56, %c0_16] : memref<72x384xf32, #tpu.memory_space<vmem>>, vector<8x384xf32>
    tpu.vector_store %arg9[%c56, %c0_16], %27 {strides = array<i32>} : memref<72x384xf32, #tpu.memory_space<vmem>>, vector<8x384xf32>,
    %29 = vector.extract_strided_slice %12 {offsets = [0, 147], sizes = [8, 384], strides = [1, 1]} : vector<8x640xf32> to vector<8x384xf32>
    %c64 = arith.constant 64 : index
    %c0_17 = arith.constant 0 : index
    %30 = vector.load %arg9[%c64, %c0_17] : memref<72x384xf32, #tpu.memory_space<vmem>>, vector<8x384xf32>
    tpu.vector_store %arg9[%c64, %c0_17], %29 {strides = array<i32>} : memref<72x384xf32, #tpu.memory_space<vmem>>, vector<8x384xf32>,
    %c0_18 = arith.constant 0 : index
    %c0_19 = arith.constant 0 : index
    %31 = vector.load %arg6[%c0_18, %c0_19] : memref<8x72xf32, #tpu.memory_space<vmem>>, vector<8x72xf32>
    %c0_20 = arith.constant 0 : index
    %c0_21 = arith.constant 0 : index
    %32 = vector.load %arg9[%c0_20, %c0_21] : memref<72x384xf32, #tpu.memory_space<vmem>>, vector<72x384xf32>
    %cst_22 = arith.constant dense<0.000000e+00> : vector<8x384xf32>
    %33 = tpu.matmul %31, %32, %cst_22 {dimension_numbers = #tpu.dot_dimension_numbers<[1], [0], [0], [1], [0, 0, 1, 1], [], []>} : vector<8x72xf32>, vector<72x384xf32>, vector<8x384xf32> -> vector<8x384xf32>
    %cst_23 = arith.constant 0.000000e+00 : f32
    %34 = vector.broadcast %cst_23 : f32 to vector<8x128xf32>
    %c0_24 = arith.constant 0 : index
    %c0_25 = arith.constant 0 : index
    %c0_26 = arith.constant 0 : index
    %35 = vector.load %arg7[%c0_24, %c0_25, %c0_26] : memref<1x8x512xf32, #tpu.memory_space<vmem>>, vector<1x8x128xf32>
    %36 = vector.shape_cast %35 : vector<1x8x128xf32> to vector<8x128xf32>
    %37 = vector.shape_cast %34 : vector<8x128xf32> to vector<1x8x128xf32>
    tpu.vector_store %arg7[%c0_24, %c0_25, %c0_26], %37 {strides = array<i32>} : memref<1x8x512xf32, #tpu.memory_space<vmem>>, vector<1x8x128xf32>,
    %c0_27 = arith.constant 0 : index
    %c0_28 = arith.constant 0 : index
    %c128 = arith.constant 128 : index
    %38 = vector.load %arg7[%c0_27, %c0_28, %c128] : memref<1x8x512xf32, #tpu.memory_space<vmem>>, vector<1x8x384xf32>
    %39 = vector.shape_cast %38 : vector<1x8x384xf32> to vector<8x384xf32>
    %40 = vector.shape_cast %33 : vector<8x384xf32> to vector<1x8x384xf32>
    tpu.vector_store %arg7[%c0_27, %c0_28, %c128], %40 {strides = array<i32>} : memref<1x8x512xf32, #tpu.memory_space<vmem>>, vector<1x8x384xf32>,
    %c0_29 = arith.constant 0 : index
    %c0_30 = arith.constant 0 : index
    %41 = vector.load %arg5[%c0_29, %c0_30] : memref<1x384xf32, #tpu.memory_space<vmem>>, vector<1x384xf32>
    %42 = vector.broadcast %41 : vector<1x384xf32> to vector<8x384xf32>
    %43 = arith.mulf %33, %42 : vector<8x384xf32>
    %cst_31 = arith.constant dense<0.000000e+00> : vector<8xf32>
    %44 = vector.multi_reduction <add>, %43, %cst_31 [1] : vector<8x384xf32> to vector<8xf32>
    %45 = vector.shape_cast %44 : vector<8xf32> to vector<8x1xf32>
    %46 = arith.mulf %43, %33 : vector<8x384xf32>
    %cst_32 = arith.constant dense<0.000000e+00> : vector<8xf32>
    %47 = vector.multi_reduction <add>, %46, %cst_32 [1] : vector<8x384xf32> to vector<8xf32>
    %48 = vector.shape_cast %47 : vector<8xf32> to vector<8x1xf32>
    %49 = tpu.concatenate %45, %48 in 1 : vector<8x1xf32>, vector<8x1xf32> -> vector<8x2xf32>
    %c0_i32 = arith.constant 0 : i32
    %50 = arith.cmpi eq, %arg0, %c0_i32 : i32
    %51 = arith.extui %50 : i1 to i32
    %c0_i32_33 = arith.constant 0 : i32
    %52 = arith.cmpi ne, %51, %c0_i32_33 : i32
    scf.if %52 {
      %cst_38 = arith.constant 0.000000e+00 : f32
      %56 = vector.broadcast %cst_38 : f32 to vector<8x2xf32>
      %c0_39 = arith.constant 0 : index
      %c0_40 = arith.constant 0 : index
      %57 = vector.load %arg8[%c0_39, %c0_40] : memref<8x2xf32, #tpu.memory_space<vmem>>, vector<8x2xf32>
      tpu.vector_store %arg8[%c0_39, %c0_40], %56 {strides = array<i32>} : memref<8x2xf32, #tpu.memory_space<vmem>>, vector<8x2xf32>,
    } else {
    }
    %c0_34 = arith.constant 0 : index
    %c0_35 = arith.constant 0 : index
    %53 = vector.load %arg8[%c0_34, %c0_35] : memref<8x2xf32, #tpu.memory_space<vmem>>, vector<8x2xf32>
    %54 = arith.addf %53, %49 : vector<8x2xf32>
    %c0_36 = arith.constant 0 : index
    %c0_37 = arith.constant 0 : index
    %55 = vector.load %arg8[%c0_36, %c0_37] : memref<8x2xf32, #tpu.memory_space<vmem>>, vector<8x2xf32>
    tpu.vector_store %arg8[%c0_36, %c0_37], %54 {strides = array<i32>} : memref<8x2xf32, #tpu.memory_space<vmem>>, vector<8x2xf32>,
    return
  }
  func.func @transform_0(%arg0: i32) -> (i32, i32, i32) {
    %c0_i32 = arith.constant 0 : i32
    %c0_i32_0 = arith.constant 0 : i32
    %c0_i32_1 = arith.constant 0 : i32
    return %arg0, %c0_i32, %c0_i32_0 : i32, i32, i32
  }
  func.func @transform_1(%arg0: i32) -> (i32, i32) {
    %c0_i32 = arith.constant 0 : i32
    %c0_i32_0 = arith.constant 0 : i32
    %c0_i32_1 = arith.constant 0 : i32
    return %c0_i32, %c0_i32_0 : i32, i32
  }
  func.func @transform_2(%arg0: i32) -> (i32, i32) {
    %c0_i32 = arith.constant 0 : i32
    %c0_i32_0 = arith.constant 0 : i32
    %c0_i32_1 = arith.constant 0 : i32
    return %c0_i32, %c0_i32_0 : i32, i32
  }
  func.func @transform_3(%arg0: i32) -> (i32, i32) {
    %c0_i32 = arith.constant 0 : i32
    %c0_i32_0 = arith.constant 0 : i32
    %c0_i32_1 = arith.constant 0 : i32
    return %c0_i32, %c0_i32_0 : i32, i32
  }
  func.func @transform_4(%arg0: i32) -> (i32, i32) {
    %c0_i32 = arith.constant 0 : i32
    %c0_i32_0 = arith.constant 0 : i32
    %c0_i32_1 = arith.constant 0 : i32
    return %c0_i32, %c0_i32_0 : i32, i32
  }
  func.func @transform_5(%arg0: i32) -> (i32, i32) {
    %c0_i32 = arith.constant 0 : i32
    %c0_i32_0 = arith.constant 0 : i32
    %c0_i32_1 = arith.constant 0 : i32
    return %c0_i32, %c0_i32_0 : i32, i32
  }
  func.func @transform_6(%arg0: i32) -> (i32, i32, i32) {
    %c0_i32 = arith.constant 0 : i32
    %c0_i32_0 = arith.constant 0 : i32
    %c0_i32_1 = arith.constant 0 : i32
    return %arg0, %c0_i32, %c0_i32_0 : i32, i32, i32
  }
  func.func @transform_7(%arg0: i32) -> (i32, i32) {
    %c0_i32 = arith.constant 0 : i32
    %c0_i32_0 = arith.constant 0 : i32
    %c0_i32_1 = arith.constant 0 : i32
    return %c0_i32, %c0_i32_0 : i32, i32
  }
}

module attributes {stable_mosaic.version = 11 : i64} {
  func.func @_bn_relu_gather_kernel(%arg0: i32, %arg1: memref<1x8x512xf32, #tpu.memory_space<vmem>>, %arg2: memref<8x1xf32, #tpu.memory_space<vmem>>, %arg3: memref<8x1xf32, #tpu.memory_space<vmem>>, %arg4: memref<1x8x256xf32, #tpu.memory_space<vmem>>) attributes {dimension_semantics = [#tpu.dimension_semantics<parallel>], iteration_bounds = array<i64: 2>, scalar_prefetch = 0 : i64, scratch_operands = 0 : i64, tpu.core_type = #tpu.core_type<tc>, window_params = [{transform_indices = @transform_0, window_bounds = array<i64: 1, 8, 512>}, {pipeline_mode = #tpu.pipeline_mode<synchronous>, transform_indices = @transform_1, window_bounds = array<i64: 8, 1>}, {pipeline_mode = #tpu.pipeline_mode<synchronous>, transform_indices = @transform_2, window_bounds = array<i64: 8, 1>}, {transform_indices = @transform_3, window_bounds = array<i64: 1, 8, 256>}]} {
    %c0 = arith.constant 0 : index
    %c0_0 = arith.constant 0 : index
    %c0_1 = arith.constant 0 : index
    %0 = vector.load %arg1[%c0, %c0_0, %c0_1] : memref<1x8x512xf32, #tpu.memory_space<vmem>>, vector<1x8x512xf32>
    %1 = vector.shape_cast %0 : vector<1x8x512xf32> to vector<8x512xf32>
    %2 = vector.extract_strided_slice %1 {offsets = [0, 128], sizes = [8, 16], strides = [1, 1]} : vector<8x512xf32> to vector<8x16xf32>
    %3 = vector.extract_strided_slice %1 {offsets = [0, 146], sizes = [8, 16], strides = [1, 1]} : vector<8x512xf32> to vector<8x16xf32>
    %4 = vector.extract_strided_slice %1 {offsets = [0, 164], sizes = [8, 16], strides = [1, 1]} : vector<8x512xf32> to vector<8x16xf32>
    %5 = vector.extract_strided_slice %1 {offsets = [0, 182], sizes = [8, 16], strides = [1, 1]} : vector<8x512xf32> to vector<8x16xf32>
    %6 = vector.extract_strided_slice %1 {offsets = [0, 200], sizes = [8, 16], strides = [1, 1]} : vector<8x512xf32> to vector<8x16xf32>
    %7 = vector.extract_strided_slice %1 {offsets = [0, 218], sizes = [8, 16], strides = [1, 1]} : vector<8x512xf32> to vector<8x16xf32>
    %8 = vector.extract_strided_slice %1 {offsets = [0, 236], sizes = [8, 16], strides = [1, 1]} : vector<8x512xf32> to vector<8x16xf32>
    %9 = vector.extract_strided_slice %1 {offsets = [0, 254], sizes = [8, 16], strides = [1, 1]} : vector<8x512xf32> to vector<8x16xf32>
    %10 = vector.extract_strided_slice %1 {offsets = [0, 272], sizes = [8, 16], strides = [1, 1]} : vector<8x512xf32> to vector<8x16xf32>
    %11 = vector.extract_strided_slice %1 {offsets = [0, 290], sizes = [8, 16], strides = [1, 1]} : vector<8x512xf32> to vector<8x16xf32>
    %12 = vector.extract_strided_slice %1 {offsets = [0, 308], sizes = [8, 16], strides = [1, 1]} : vector<8x512xf32> to vector<8x16xf32>
    %13 = vector.extract_strided_slice %1 {offsets = [0, 326], sizes = [8, 16], strides = [1, 1]} : vector<8x512xf32> to vector<8x16xf32>
    %14 = vector.extract_strided_slice %1 {offsets = [0, 344], sizes = [8, 16], strides = [1, 1]} : vector<8x512xf32> to vector<8x16xf32>
    %15 = vector.extract_strided_slice %1 {offsets = [0, 362], sizes = [8, 16], strides = [1, 1]} : vector<8x512xf32> to vector<8x16xf32>
    %16 = vector.extract_strided_slice %1 {offsets = [0, 380], sizes = [8, 16], strides = [1, 1]} : vector<8x512xf32> to vector<8x16xf32>
    %17 = vector.extract_strided_slice %1 {offsets = [0, 398], sizes = [8, 16], strides = [1, 1]} : vector<8x512xf32> to vector<8x16xf32>
    %18 = tpu.concatenate %2, %3, %4, %5, %6, %7, %8, %9, %10, %11, %12, %13, %14, %15, %16, %17 in 1 : vector<8x16xf32>, vector<8x16xf32>, vector<8x16xf32>, vector<8x16xf32>, vector<8x16xf32>, vector<8x16xf32>, vector<8x16xf32>, vector<8x16xf32>, vector<8x16xf32>, vector<8x16xf32>, vector<8x16xf32>, vector<8x16xf32>, vector<8x16xf32>, vector<8x16xf32>, vector<8x16xf32>, vector<8x16xf32> -> vector<8x256xf32>
    %c0_2 = arith.constant 0 : index
    %c0_3 = arith.constant 0 : index
    %19 = vector.load %arg2[%c0_2, %c0_3] : memref<8x1xf32, #tpu.memory_space<vmem>>, vector<8x1xf32>
    %20 = vector.broadcast %19 : vector<8x1xf32> to vector<8x256xf32>
    %21 = arith.mulf %18, %20 : vector<8x256xf32>
    %c0_4 = arith.constant 0 : index
    %c0_5 = arith.constant 0 : index
    %22 = vector.load %arg3[%c0_4, %c0_5] : memref<8x1xf32, #tpu.memory_space<vmem>>, vector<8x1xf32>
    %23 = vector.broadcast %22 : vector<8x1xf32> to vector<8x256xf32>
    %24 = arith.addf %21, %23 : vector<8x256xf32>
    %cst = arith.constant 0.000000e+00 : f32
    %25 = vector.broadcast %cst : f32 to vector<8x256xf32>
    %26 = arith.maximumf %24, %25 : vector<8x256xf32>
    %c0_6 = arith.constant 0 : index
    %c0_7 = arith.constant 0 : index
    %c0_8 = arith.constant 0 : index
    %27 = vector.load %arg4[%c0_6, %c0_7, %c0_8] : memref<1x8x256xf32, #tpu.memory_space<vmem>>, vector<1x8x256xf32>
    %28 = vector.shape_cast %27 : vector<1x8x256xf32> to vector<8x256xf32>
    %29 = vector.shape_cast %26 : vector<8x256xf32> to vector<1x8x256xf32>
    tpu.vector_store %arg4[%c0_6, %c0_7, %c0_8], %29 {strides = array<i32>} : memref<1x8x256xf32, #tpu.memory_space<vmem>>, vector<1x8x256xf32>,
    return
  }
  func.func @transform_0(%arg0: i32) -> (i32, i32, i32) {
    %c0_i32 = arith.constant 0 : i32
    %c0_i32_0 = arith.constant 0 : i32
    %c0_i32_1 = arith.constant 0 : i32
    return %arg0, %c0_i32, %c0_i32_0 : i32, i32, i32
  }
  func.func @transform_1(%arg0: i32) -> (i32, i32) {
    %c0_i32 = arith.constant 0 : i32
    %c0_i32_0 = arith.constant 0 : i32
    %c0_i32_1 = arith.constant 0 : i32
    return %c0_i32, %c0_i32_0 : i32, i32
  }
  func.func @transform_2(%arg0: i32) -> (i32, i32) {
    %c0_i32 = arith.constant 0 : i32
    %c0_i32_0 = arith.constant 0 : i32
    %c0_i32_1 = arith.constant 0 : i32
    return %c0_i32, %c0_i32_0 : i32, i32
  }
  func.func @transform_3(%arg0: i32) -> (i32, i32, i32) {
    %c0_i32 = arith.constant 0 : i32
    %c0_i32_0 = arith.constant 0 : i32
    %c0_i32_1 = arith.constant 0 : i32
    return %arg0, %c0_i32, %c0_i32_0 : i32, i32, i32
  }
}

</mosaic_0001>

<llo_original>
// kernel: double_conv2d.3
$region0: #{double_conv2d.3}
  #allocation0 [shape = 'u32[]', space=smem, size = 0x4, offset = 0x4, fixed_abs, tag = 'smem constant byte address 0x4 - core index']
  #allocation1 [shape = 'u32[144,128]{1,0:T(1,128)}', space=vmem, size = 0x12000, scoped, tag = 'internal scratch']
  #allocation2 [shape = 'f32[72,512]{1,0:T(8,128)}', space=vmem, size = 0x24000, scoped, tag = 'scratch operand']
  %s0 = inlined_call_operand.vmem [shape: f32[2,8,558], index: 0, kind: input, shape index: {}]
  %s1 = inlined_call_operand.vmem [shape: f32[1,512], index: 1, kind: input, shape index: {}]
  %s2 = inlined_call_operand.vmem [shape: f32[8,72], index: 2, kind: input, shape index: {}]
  %s3 = inlined_call_operand.vmem [shape: f32[2,8,640], index: 3, kind: output, shape index: {0}]
  %s4 = inlined_call_operand.vmem [shape: f32[8,2], index: 4, kind: output, shape index: {1}]
  %5 = xla_tuple %s3, %s4
  %s6 = sld [smem:[#allocation0]]
  $region57: #{double_conv2d.3} parent=0
    _
  %s8 = ssub.s32 1, %s6
  %s9 = scalar_select 0, %s8, %s6
  loop: start=0, step=1, limit=4
  $region2: #{double_conv2d.3} parent=0 // loop_pre_header
    _
  $region3: #{double_conv2d.3} parent=0 // loop_header
    %s11 = sphi 0, %s15
    %p12 = scmp.ge.s32.totalorder %s11, 4
    %s21 = sphi 0, %s23
    %s24 = sphi 0, %s21
    %s25 = sphi 0, %s24
    %s41 = sphi 0, %s25
    %s45 = sphi 0, %s45
    %s47 = sphi 0, %s45
    %s48 = sphi 0, %s47
    %s62 = sphi 0, %s48
    %s66 = sphi 0, %s66
    %s68 = sphi 0, %s66
    %s69 = sphi 0, %s68
    %s83 = sphi 0, %s69
    %s89 = sphi 0, %s91
    %s92 = sphi 0, %s89
    %s93 = sphi 0, %s92
    %s109 = sphi 0, %s93
    %s113 = sphi 0, %s113
    %s115 = sphi 0, %s113
    %s116 = sphi 0, %s115
    %s130 = sphi 0, %s116
  $region4: #{double_conv2d.3} parent=0 // loop_header_branch
    %14 = sbr.rel (%p12) target = $region8
  $region5: #{double_conv2d.3} parent=0 // loop_body
    %s16 = ssub.s32 %s11, 1
    %s17 = ssub.s32 %s11, 2
    %s18 = sadd.s32 %s11, 1
    %s19 = ssub.s32 %s11, %s18
    %p20 = scmp.eq.s32.totalorder %s19, 0
    %s22 = sadd.s32 %s21, 1
    %s23 = scalar_select %p20, %s21, %s22
    %p26 = pneg %p20
    %p27 = scmp.eq.s32.totalorder %s11, 1
    %p28 = por %p26, %p27
    %p29 = scmp.ne.s32.totalorder %s21, %s24
    %p30 = scmp.eq.s32.totalorder %s11, 0
    %p31 = por %p29, %p30
    %p32 = scmp.ne.s32.totalorder %s21, %s24
    %p33 = scmp.eq.s32.totalorder %s16, 1
    %p34 = por %p32, %p33
    %p35 = scmp.ne.s32.totalorder %s24, %s25
    %p36 = scmp.eq.s32.totalorder %s16, 0
    %p37 = por %p35, %p36
    %p38 = scmp.ne.s32.totalorder %s24, %s25
    %p39 = scmp.eq.s32.totalorder %s17, 1
    %p40 = por %p38, %p39
    %p42 = scmp.ne.s32.totalorder %s25, %s41
    %p43 = scmp.eq.s32.totalorder %s17, 0
    %p44 = por %p42, %p43
    %s46 = sadd.s32 %s45, 1
    %p49 = scmp.eq.s32.totalorder %s11, 1
    %p50 = scmp.ne.s32.totalorder %s45, %s47
    %p51 = scmp.eq.s32.totalorder %s11, 0
    %p52 = por %p50, %p51
    %p53 = scmp.ne.s32.totalorder %s45, %s47
    %p54 = scmp.eq.s32.totalorder %s16, 1
    %p55 = por %p53, %p54
    %p56 = scmp.ne.s32.totalorder %s47, %s48
    %p57 = scmp.eq.s32.totalorder %s16, 0
    %p58 = por %p56, %p57
    %p59 = scmp.ne.s32.totalorder %s47, %s48
    %p60 = scmp.eq.s32.totalorder %s17, 1
    %p61 = por %p59, %p60
    %p63 = scmp.ne.s32.totalorder %s48, %s62
    %p64 = scmp.eq.s32.totalorder %s17, 0
    %p65 = por %p63, %p64
    %s67 = sadd.s32 %s66, 1
    %p70 = scmp.eq.s32.totalorder %s11, 1
    %p71 = scmp.ne.s32.totalorder %s66, %s68
    %p72 = scmp.eq.s32.totalorder %s11, 0
    %p73 = por %p71, %p72
    %p74 = scmp.ne.s32.totalorder %s66, %s68
    %p75 = scmp.eq.s32.totalorder %s16, 1
    %p76 = por %p74, %p75
    %p77 = scmp.ne.s32.totalorder %s68, %s69
    %p78 = scmp.eq.s32.totalorder %s16, 0
    %p79 = por %p77, %p78
    %p80 = scmp.ne.s32.totalorder %s68, %s69
    %p81 = scmp.eq.s32.totalorder %s17, 1
    %p82 = por %p80, %p81
    %p84 = scmp.ne.s32.totalorder %s69, %s83
    %p85 = scmp.eq.s32.totalorder %s17, 0
    %p86 = por %p84, %p85
    %s87 = ssub.s32 %s11, %s18
    %p88 = scmp.eq.s32.totalorder %s87, 0
    %s90 = sadd.s32 %s89, 1
    %s91 = scalar_select %p88, %s89, %s90
    %p94 = pneg %p88
    %p95 = scmp.eq.s32.totalorder %s11, 1
    %p96 = por %p94, %p95
    %p97 = scmp.ne.s32.totalorder %s89, %s92
    %p98 = scmp.eq.s32.totalorder %s11, 0
    %p99 = por %p97, %p98
    %p100 = scmp.ne.s32.totalorder %s89, %s92
    %p101 = scmp.eq.s32.totalorder %s16, 1
    %p102 = por %p100, %p101
    %p103 = scmp.ne.s32.totalorder %s92, %s93
    %p104 = scmp.eq.s32.totalorder %s16, 0
    %p105 = por %p103, %p104
    %p106 = scmp.ne.s32.totalorder %s92, %s93
    %p107 = scmp.eq.s32.totalorder %s17, 1
    %p108 = por %p106, %p107
    %p110 = scmp.ne.s32.totalorder %s93, %s109
    %p111 = scmp.eq.s32.totalorder %s17, 0
    %p112 = por %p110, %p111
    %s114 = sadd.s32 %s113, 1
    %p117 = scmp.eq.s32.totalorder %s11, 1
    %p118 = scmp.ne.s32.totalorder %s113, %s115
    %p119 = scmp.eq.s32.totalorder %s11, 0
    %p120 = por %p118, %p119
    %p121 = scmp.ne.s32.totalorder %s113, %s115
    %p122 = scmp.eq.s32.totalorder %s16, 1
    %p123 = por %p121, %p122
    %p124 = scmp.ne.s32.totalorder %s115, %s116
    %p125 = scmp.eq.s32.totalorder %s16, 0
    %p126 = por %p124, %p125
    %p127 = scmp.ne.s32.totalorder %s115, %s116
    %p128 = scmp.eq.s32.totalorder %s17, 1
    %p129 = por %p127, %p128
    %p131 = scmp.ne.s32.totalorder %s116, %s130
    %p132 = scmp.eq.s32.totalorder %s17, 0
    %p133 = por %p131, %p132
    %p134 = scmp.le.s32.totalorder 1, %s11
    %p135 = scmp.lt.s32.totalorder %s11, 3
    %p136 = pnand %p134, %p135
    %p137 = pneg %p136
    // Predicated region
    $region9: #{double_conv2d.3} parent=5 // pred_check
      _
    $region10: #{double_conv2d.3} parent=5 // pred_check_branch
      %139 = sbr.rel (%p136) target = $region12
    $region11: #{double_conv2d.3} parent=5 // pred_region
      %s140 = ssub.s32 %s11, 1
      // Predicated region
      $region13: #{double_conv2d.3} parent=11 // pred_check
        %p141 = pneg %p58
      $region14: #{double_conv2d.3} parent=11 // pred_check_branch
        %143 = sbr.rel (%p141) target = $region16
      $region15: #{double_conv2d.3} parent=11 // pred_region
        _
      $region16: #{double_conv2d.3} parent=11 // pred_fallthru
        _
      // Predicated region
      $region17: #{double_conv2d.3} parent=11 // pred_check
        %p144 = pneg %p79
      $region18: #{double_conv2d.3} parent=11 // pred_check_branch
        %146 = sbr.rel (%p144) target = $region20
      $region19: #{double_conv2d.3} parent=11 // pred_region
        _
      $region20: #{double_conv2d.3} parent=11 // pred_fallthru
        _
    $region12: #{double_conv2d.3} parent=5 // pred_fallthru
      _
    %p147 = scmp.lt.s32.totalorder %s11, 2
    // Predicated region
    $region21: #{double_conv2d.3} parent=5 // pred_check
      %p148 = pneg %p147
    $region22: #{double_conv2d.3} parent=5 // pred_check_branch
      %150 = sbr.rel (%p148) target = $region24
    $region23: #{double_conv2d.3} parent=5 // pred_region
      // Predicated region
      $region25: #{double_conv2d.3} parent=23 // pred_check
        %p151 = pneg %p31
      $region26: #{double_conv2d.3} parent=23 // pred_check_branch
        %153 = sbr.rel (%p151) target = $region28
      $region27: #{double_conv2d.3} parent=23 // pred_region
        %p154 = scmp.lt.s32.totalorder %s11, 1
        %s155 = scalar_select %p154, %s11, 1
        %s156 = smul.addr %s155, 5
        %s157 = smul.addr %s156, 8
        %s158 = scalar_lea.vmem %s0, %s157
      $region28: #{double_conv2d.3} parent=23 // pred_fallthru
        _
    $region24: #{double_conv2d.3} parent=5 // pred_fallthru
      _
    %p159 = scmp.le.s32.totalorder 1, %s11
    %p160 = scmp.lt.s32.totalorder %s11, 3
    %p161 = pnand %p159, %p160
    %p162 = pneg %p161
    // Predicated region
    $region29: #{double_conv2d.3} parent=5 // pred_check
      _
    $region30: #{double_conv2d.3} parent=5 // pred_check_branch
      %164 = sbr.rel (%p161) target = $region32
    $region31: #{double_conv2d.3} parent=5 // pred_region
      %s165 = ssub.s32 %s11, 1
      %p166 = scmp.lt.s32.totalorder %s16, 1
      %s167 = scalar_select %p166, %s16, 1
      %s168 = smul.addr %s167, 5
      %s169 = smul.addr %s168, 8
      %s170 = scalar_lea.vmem %s0, %s169
      %p171 = pneg %p37
      %p172 = pneg %p34
      %p173 = pneg %p58
      %p174 = pneg %p55
      %p175 = pneg %p79
      %p176 = pneg %p76
      %p177 = pneg %p105
      %p178 = pneg %p102
      %p179 = scmp.lt.s32.totalorder %s16, 1
      %s180 = scalar_select %p179, %s16, 1
      %s181 = smul.addr %s180, 5
      %s182 = smul.addr %s181, 8
      %s183 = scalar_lea.vmem %s3, %s182
      %p184 = pneg %p126
      %p185 = pneg %p123
      %p186 = scmp.lt.s32.totalorder %s16, 1
      %s187 = scalar_select %p186, %s16, 1
      %s188 = smul.addr %s187, 5
      %s189 = smul.addr %s188, 8
      %s190 = scalar_lea.vmem %s0, %s189
      %p191 = scmp.lt.s32.totalorder %s16, 1
      %s192 = scalar_select %p191, %s16, 1
      %s193 = smul.addr %s192, 5
      %s194 = smul.addr %s193, 8
      %s195 = scalar_lea.vmem %s3, %s194
      %v196 = vld [vmem:[%s190] sm:$0xff]
      %v197 = vld [vmem:[%s190 + $0x8] sm:$0xff]
      %v198 = vld [vmem:[%s190 + $0x10] sm:$0xff]
      %v199 = vld [vmem:[%s190 + $0x18] sm:$0xff]
      %v200 = vld [vmem:[%s190 + $0x20] sm:$0xff]
      %201 = vst [vmem:[#allocation2] sm:$0xff] %v196
      %202 = vst [vmem:[#allocation2 + $0x8] sm:$0xff] %v197
      %203 = vst [vmem:[#allocation2 + $0x10] sm:$0xff] %v198
      %204 = vst [vmem:[#allocation2 + $0x18] sm:$0xff] %v199
      %210 = vrot.lane.b32.xlu0 %v196, 127
      %v211 = vpop.permute.xlu0 %210
      %212 = vrot.lane.b32.xlu0 %v197, 127
      %v213 = vpop.permute.xlu0 %212
      %214 = vrot.lane.b32.xlu0 %v198, 127
      %v215 = vpop.permute.xlu0 %214
      %216 = vrot.lane.b32.xlu0 %v199, 127
      %v217 = vpop.permute.xlu0 %216
      %218 = vrot.lane.b32.xlu0 %v200, 127
      %v219 = vpop.permute.xlu0 %218
      %vm220 = vcmask 1039360
      %v221 = vsel %vm220, %v211, %v213
      %v222 = vsel %vm220, %v213, %v215
      %v223 = vsel %vm220, %v215, %v217
      %v224 = vsel %vm220, %v217, %v219
      %229 = vst [vmem:[#allocation2 + $0x20] sm:$0xff] %v221
      %230 = vst [vmem:[#allocation2 + $0x28] sm:$0xff] %v222
      %231 = vst [vmem:[#allocation2 + $0x30] sm:$0xff] %v223
      %232 = vst [vmem:[#allocation2 + $0x38] sm:$0xff] %v224
      %233 = vrot.lane.b32.xlu0 %v196, 126
      %v234 = vpop.permute.xlu0 %233
      %235 = vrot.lane.b32.xlu0 %v197, 126
      %v236 = vpop.permute.xlu0 %235
      %237 = vrot.lane.b32.xlu0 %v198, 126
      %v238 = vpop.permute.xlu0 %237
      %239 = vrot.lane.b32.xlu0 %v199, 126
      %v240 = vpop.permute.xlu0 %239
      %241 = vrot.lane.b32.xlu0 %v200, 126
      %v242 = vpop.permute.xlu0 %241
      %vm243 = vcmask 1031168
      %v244 = vsel %vm243, %v234, %v236
      %v245 = vsel %vm243, %v236, %v238
      %v246 = vsel %vm243, %v238, %v240
      %v247 = vsel %vm243, %v240, %v242
      %252 = vst [vmem:[#allocation2 + $0x40] sm:$0xff] %v244
      %253 = vst [vmem:[#allocation2 + $0x48] sm:$0xff] %v245
      %254 = vst [vmem:[#allocation2 + $0x50] sm:$0xff] %v246
      %255 = vst [vmem:[#allocation2 + $0x58] sm:$0xff] %v247
      %256 = vrot.lane.b32.xlu0 %v196, 110
      %v257 = vpop.permute.xlu0 %256
      %258 = vrot.lane.b32.xlu0 %v197, 110
      %v259 = vpop.permute.xlu0 %258
      %260 = vrot.lane.b32.xlu0 %v198, 110
      %v261 = vpop.permute.xlu0 %260
      %262 = vrot.lane.b32.xlu0 %v199, 110
      %v263 = vpop.permute.xlu0 %262
      %264 = vrot.lane.b32.xlu0 %v200, 110
      %v265 = vpop.permute.xlu0 %264
      %vm266 = vcmask 900096
      %v267 = vsel %vm266, %v257, %v259
      %v268 = vsel %vm266, %v259, %v261
      %v269 = vsel %vm266, %v261, %v263
      %v270 = vsel %vm266, %v263, %v265
      %275 = vst [vmem:[#allocation2 + $0x60] sm:$0xff] %v267
      %276 = vst [vmem:[#allocation2 + $0x68] sm:$0xff] %v268
      %277 = vst [vmem:[#allocation2 + $0x70] sm:$0xff] %v269
      %278 = vst [vmem:[#allocation2 + $0x78] sm:$0xff] %v270
      %279 = vrot.lane.b32.xlu0 %v196, 109
      %v280 = vpop.permute.xlu0 %279
      %281 = vrot.lane.b32.xlu0 %v197, 109
      %v282 = vpop.permute.xlu0 %281
      %283 = vrot.lane.b32.xlu0 %v198, 109
      %v284 = vpop.permute.xlu0 %283
      %285 = vrot.lane.b32.xlu0 %v199, 109
      %v286 = vpop.permute.xlu0 %285
      %287 = vrot.lane.b32.xlu0 %v200, 109
      %v288 = vpop.permute.xlu0 %287
      %vm289 = vcmask 891904
      %v290 = vsel %vm289, %v280, %v282
      %v291 = vsel %vm289, %v282, %v284
      %v292 = vsel %vm289, %v284, %v286
      %v293 = vsel %vm289, %v286, %v288
      %298 = vst [vmem:[#allocation2 + $0x80] sm:$0xff] %v290
      %299 = vst [vmem:[#allocation2 + $0x88] sm:$0xff] %v291
      %300 = vst [vmem:[#allocation2 + $0x90] sm:$0xff] %v292
      %301 = vst [vmem:[#allocation2 + $0x98] sm:$0xff] %v293
      %302 = vrot.lane.b32.xlu0 %v196, 108
      %v303 = vpop.permute.xlu0 %302
      %304 = vrot.lane.b32.xlu0 %v197, 108
      %v305 = vpop.permute.xlu0 %304
      %306 = vrot.lane.b32.xlu0 %v198, 108
      %v307 = vpop.permute.xlu0 %306
      %308 = vrot.lane.b32.xlu0 %v199, 108
      %v309 = vpop.permute.xlu0 %308
      %310 = vrot.lane.b32.xlu0 %v200, 108
      %v311 = vpop.permute.xlu0 %310
      %vm312 = vcmask 883712
      %v313 = vsel %vm312, %v303, %v305
      %v314 = vsel %vm312, %v305, %v307
      %v315 = vsel %vm312, %v307, %v309
      %v316 = vsel %vm312, %v309, %v311
      %321 = vst [vmem:[#allocation2 + $0xa0] sm:$0xff] %v313
      %322 = vst [vmem:[#allocation2 + $0xa8] sm:$0xff] %v314
      %323 = vst [vmem:[#allocation2 + $0xb0] sm:$0xff] %v315
      %324 = vst [vmem:[#allocation2 + $0xb8] sm:$0xff] %v316
      %325 = vrot.lane.b32.xlu0 %v196, 92
      %v326 = vpop.permute.xlu0 %325
      %327 = vrot.lane.b32.xlu0 %v197, 92
      %v328 = vpop.permute.xlu0 %327
      %329 = vrot.lane.b32.xlu0 %v198, 92
      %v330 = vpop.permute.xlu0 %329
      %331 = vrot.lane.b32.xlu0 %v199, 92
      %v332 = vpop.permute.xlu0 %331
      %333 = vrot.lane.b32.xlu0 %v200, 92
      %v334 = vpop.permute.xlu0 %333
      %vm335 = vcmask 752640
      %v336 = vsel %vm335, %v326, %v328
      %v337 = vsel %vm335, %v328, %v330
      %v338 = vsel %vm335, %v330, %v332
      %v339 = vsel %vm335, %v332, %v334
      %344 = vst [vmem:[#allocation2 + $0xc0] sm:$0xff] %v336
      %345 = vst [vmem:[#allocation2 + $0xc8] sm:$0xff] %v337
      %346 = vst [vmem:[#allocation2 + $0xd0] sm:$0xff] %v338
      %347 = vst [vmem:[#allocation2 + $0xd8] sm:$0xff] %v339
      %348 = vrot.lane.b32.xlu0 %v196, 91
      %v349 = vpop.permute.xlu0 %348
      %350 = vrot.lane.b32.xlu0 %v197, 91
      %v351 = vpop.permute.xlu0 %350
      %352 = vrot.lane.b32.xlu0 %v198, 91
      %v353 = vpop.permute.xlu0 %352
      %354 = vrot.lane.b32.xlu0 %v199, 91
      %v355 = vpop.permute.xlu0 %354
      %356 = vrot.lane.b32.xlu0 %v200, 91
      %v357 = vpop.permute.xlu0 %356
      %vm358 = vcmask 744448
      %v359 = vsel %vm358, %v349, %v351
      %v360 = vsel %vm358, %v351, %v353
      %v361 = vsel %vm358, %v353, %v355
      %v362 = vsel %vm358, %v355, %v357
      %367 = vst [vmem:[#allocation2 + $0xe0] sm:$0xff] %v359
      %368 = vst [vmem:[#allocation2 + $0xe8] sm:$0xff] %v360
      %369 = vst [vmem:[#allocation2 + $0xf0] sm:$0xff] %v361
      %370 = vst [vmem:[#allocation2 + $0xf8] sm:$0xff] %v362
      %371 = vrot.lane.b32.xlu0 %v196, 90
      %v372 = vpop.permute.xlu0 %371
      %373 = vrot.lane.b32.xlu0 %v197, 90
      %v374 = vpop.permute.xlu0 %373
      %375 = vrot.lane.b32.xlu0 %v198, 90
      %v376 = vpop.permute.xlu0 %375
      %377 = vrot.lane.b32.xlu0 %v199, 90
      %v378 = vpop.permute.xlu0 %377
      %379 = vrot.lane.b32.xlu0 %v200, 90
      %v380 = vpop.permute.xlu0 %379
      %vm381 = vcmask 736256
      %v382 = vsel %vm381, %v372, %v374
      %v383 = vsel %vm381, %v374, %v376
      %v384 = vsel %vm381, %v376, %v378
      %v385 = vsel %vm381, %v378, %v380
      %390 = vst [vmem:[#allocation2 + $0x100] sm:$0xff] %v382
      %391 = vst [vmem:[#allocation2 + $0x108] sm:$0xff] %v383
      %392 = vst [vmem:[#allocation2 + $0x110] sm:$0xff] %v384
      %393 = vst [vmem:[#allocation2 + $0x118] sm:$0xff] %v385
      %v394 = vld [vmem:[%s2] sm:$0xff]
      %v395 = vld [vmem:[#allocation2] sm:$0xff]
      %v396 = vld [vmem:[#allocation2 + $0x8] sm:$0xff]
      %v397 = vld [vmem:[#allocation2 + $0x10] sm:$0xff]
      %v398 = vld [vmem:[#allocation2 + $0x18] sm:$0xff]
      %v399 = vld [vmem:[#allocation2 + $0x20] sm:$0xff]
      %v400 = vld [vmem:[#allocation2 + $0x28] sm:$0xff]
      %v401 = vld [vmem:[#allocation2 + $0x30] sm:$0xff]
      %v402 = vld [vmem:[#allocation2 + $0x38] sm:$0xff]
      %v403 = vld [vmem:[#allocation2 + $0x40] sm:$0xff]
      %v404 = vld [vmem:[#allocation2 + $0x48] sm:$0xff]
      %v405 = vld [vmem:[#allocation2 + $0x50] sm:$0xff]
      %v406 = vld [vmem:[#allocation2 + $0x58] sm:$0xff]
      %v407 = vld [vmem:[#allocation2 + $0x60] sm:$0xff]
      %v408 = vld [vmem:[#allocation2 + $0x68] sm:$0xff]
      %v409 = vld [vmem:[#allocation2 + $0x70] sm:$0xff]
      %v410 = vld [vmem:[#allocation2 + $0x78] sm:$0xff]
      %v411 = vld [vmem:[#allocation2 + $0x80] sm:$0xff]
      %v412 = vld [vmem:[#allocation2 + $0x88] sm:$0xff]
      %v413 = vld [vmem:[#allocation2 + $0x90] sm:$0xff]
      %v414 = vld [vmem:[#allocation2 + $0x98] sm:$0xff]
      %v415 = vld [vmem:[#allocation2 + $0xa0] sm:$0xff]
      %v416 = vld [vmem:[#allocation2 + $0xa8] sm:$0xff]
      %v417 = vld [vmem:[#allocation2 + $0xb0] sm:$0xff]
      %v418 = vld [vmem:[#allocation2 + $0xb8] sm:$0xff]
      %v419 = vld [vmem:[#allocation2 + $0xc0] sm:$0xff]
      %v420 = vld [vmem:[#allocation2 + $0xc8] sm:$0xff]
      %v421 = vld [vmem:[#allocation2 + $0xd0] sm:$0xff]
      %v422 = vld [vmem:[#allocation2 + $0xd8] sm:$0xff]
      %v423 = vld [vmem:[#allocation2 + $0xe0] sm:$0xff]
      %v424 = vld [vmem:[#allocation2 + $0xe8] sm:$0xff]
      %v425 = vld [vmem:[#allocation2 + $0xf0] sm:$0xff]
      %v426 = vld [vmem:[#allocation2 + $0xf8] sm:$0xff]
      %v427 = vld [vmem:[#allocation2 + $0x100] sm:$0xff]
      %v428 = vld [vmem:[#allocation2 + $0x108] sm:$0xff]
      %v429 = vld [vmem:[#allocation2 + $0x110] sm:$0xff]
      %v430 = vld [vmem:[#allocation2 + $0x118] sm:$0xff]
      %vm431 = vcmask 588800
      %v433 = vsel %vm431, %v394, 0
      %435 = vmatprep.subr.mxu0 0.0
      %436 = vmatpush1.msra.mxu0 0.0
      %437 = vmatprep.subr.mxu0 0.0
      %438 = vmatpush1.msra.mxu0 0.0
      %439 = vmatprep.subr.mxu0 0.0
      %440 = vmatpush1.msra.mxu0 0.0
      %441 = vmatprep.subr.mxu0 0.0
      %442 = vmatpush1.msra.mxu0 0.0
      %443 = vmatprep.subr.mxu0 0.0
      %444 = vmatpush1.msra.mxu0 0.0
      %445 = vmatprep.subr.mxu0 0.0
      %446 = vmatpush1.msra.mxu0 0.0
      %447 = vmatprep.subr.mxu0 0.0
      %448 = vmatpush1.msra.mxu0 0.0
      %449 = vmatprep.subr.mxu0 %v428
      %450 = vmatpush1.msra.mxu0 %v427
      %451 = vmatprep.subr.mxu0 %v424
      %452 = vmatpush1.msra.mxu0 %v423
      %453 = vmatprep.subr.mxu0 %v420
      %454 = vmatpush1.msra.mxu0 %v419
      %455 = vmatprep.subr.mxu0 %v416
      %456 = vmatpush1.msra.mxu0 %v415
      %457 = vmatprep.subr.mxu0 %v412
      %458 = vmatpush1.msra.mxu0 %v411
      %459 = vmatprep.subr.mxu0 %v408
      %460 = vmatpush1.msra.mxu0 %v407
      %461 = vmatprep.subr.mxu0 %v404
      %462 = vmatpush1.msra.mxu0 %v403
      %463 = vmatprep.subr.mxu0 %v400
      %464 = vmatpush1.msra.mxu0 %v399
      %465 = vmatprep.subr.mxu0 %v396
      %466 = vmatpush1.msra.mxu0 %v395
      %467 = vmatprep.subr.mxu0 0.0
      %468 = vmatpush2.msra.mxu0 0.0
      %469 = vmatprep.subr.mxu0 0.0
      %470 = vmatpush2.msra.mxu0 0.0
      %471 = vmatprep.subr.mxu0 0.0
      %472 = vmatpush2.msra.mxu0 0.0
      %473 = vmatprep.subr.mxu0 0.0
      %474 = vmatpush2.msra.mxu0 0.0
      %475 = vmatprep.subr.mxu0 0.0
      %476 = vmatpush2.msra.mxu0 0.0
      %477 = vmatprep.subr.mxu0 0.0
      %478 = vmatpush2.msra.mxu0 0.0
      %479 = vmatprep.subr.mxu0 0.0
      %480 = vmatpush2.msra.mxu0 0.0
      %481 = vmatprep.subr.mxu0 0.0
      %482 = vmatpush2.msra.mxu0 0.0
      %483 = vmatprep.subr.mxu0 0.0
      %484 = vmatpush2.msra.mxu0 0.0
      %485 = vmatprep.subr.mxu0 0.0
      %486 = vmatpush2.msra.mxu0 0.0
      %487 = vmatprep.subr.mxu0 0.0
      %488 = vmatpush2.msra.mxu0 0.0
      %489 = vmatprep.subr.mxu0 0.0
      %490 = vmatpush2.msra.mxu0 0.0
      %491 = vmatprep.subr.mxu0 0.0
      %492 = vmatpush2.msra.mxu0 0.0
      %493 = vmatprep.subr.mxu0 0.0
      %494 = vmatpush2.msra.mxu0 0.0
      %495 = vmatprep.subr.mxu0 0.0
      %496 = vmatpush2.msra.mxu0 0.0
      %497 = vmatprep.subr.mxu0 0.0
      %498 = vmatpush2.msra.mxu0 0.0
      %499 = vmatprep.mubr.f32.mxu0 0.0
      %500 = vmatmul.mubr.f32.gmra.mxu0 %v433
      %v501 = vpop.f32.mrf.mxu0
      %v502 = vadd.f32 0.0, %v501
      %v503 = vpop.f32.mrf.mxu0
      %v504 = vadd.f32 0.0, %v503
      %505 = vdwg.mxu0
      %506 = vmatprep.subr.mxu0 0.0
      %507 = vmatpush1.msra.mxu0 0.0
      %508 = vmatprep.subr.mxu0 0.0
      %509 = vmatpush1.msra.mxu0 0.0
      %510 = vmatprep.subr.mxu0 0.0
      %511 = vmatpush1.msra.mxu0 0.0
      %512 = vmatprep.subr.mxu0 0.0
      %513 = vmatpush1.msra.mxu0 0.0
      %514 = vmatprep.subr.mxu0 0.0
      %515 = vmatpush1.msra.mxu0 0.0
      %516 = vmatprep.subr.mxu0 0.0
      %517 = vmatpush1.msra.mxu0 0.0
      %518 = vmatprep.subr.mxu0 0.0
      %519 = vmatpush1.msra.mxu0 0.0
      %520 = vmatprep.subr.mxu0 %v430
      %521 = vmatpush1.msra.mxu0 %v429
      %522 = vmatprep.subr.mxu0 %v426
      %523 = vmatpush1.msra.mxu0 %v425
      %524 = vmatprep.subr.mxu0 %v422
      %525 = vmatpush1.msra.mxu0 %v421
      %526 = vmatprep.subr.mxu0 %v418
      %527 = vmatpush1.msra.mxu0 %v417
      %528 = vmatprep.subr.mxu0 %v414
      %529 = vmatpush1.msra.mxu0 %v413
      %530 = vmatprep.subr.mxu0 %v410
      %531 = vmatpush1.msra.mxu0 %v409
      %532 = vmatprep.subr.mxu0 %v406
      %533 = vmatpush1.msra.mxu0 %v405
      %534 = vmatprep.subr.mxu0 %v402
      %535 = vmatpush1.msra.mxu0 %v401
      %536 = vmatprep.subr.mxu0 %v398
      %537 = vmatpush1.msra.mxu0 %v397
      %538 = vmatprep.subr.mxu0 0.0
      %539 = vmatpush2.msra.mxu0 0.0
      %540 = vmatprep.subr.mxu0 0.0
      %541 = vmatpush2.msra.mxu0 0.0
      %542 = vmatprep.subr.mxu0 0.0
      %543 = vmatpush2.msra.mxu0 0.0
      %544 = vmatprep.subr.mxu0 0.0
      %545 = vmatpush2.msra.mxu0 0.0
      %546 = vmatprep.subr.mxu0 0.0
      %547 = vmatpush2.msra.mxu0 0.0
      %548 = vmatprep.subr.mxu0 0.0
      %549 = vmatpush2.msra.mxu0 0.0
      %550 = vmatprep.subr.mxu0 0.0
      %551 = vmatpush2.msra.mxu0 0.0
      %552 = vmatprep.subr.mxu0 0.0
      %553 = vmatpush2.msra.mxu0 0.0
      %554 = vmatprep.subr.mxu0 0.0
      %555 = vmatpush2.msra.mxu0 0.0
      %556 = vmatprep.subr.mxu0 0.0
      %557 = vmatpush2.msra.mxu0 0.0
      %558 = vmatprep.subr.mxu0 0.0
      %559 = vmatpush2.msra.mxu0 0.0
      %560 = vmatprep.subr.mxu0 0.0
      %561 = vmatpush2.msra.mxu0 0.0
      %562 = vmatprep.subr.mxu0 0.0
      %563 = vmatpush2.msra.mxu0 0.0
      %564 = vmatprep.subr.mxu0 0.0
      %565 = vmatpush2.msra.mxu0 0.0
      %566 = vmatprep.subr.mxu0 0.0
      %567 = vmatpush2.msra.mxu0 0.0
      %568 = vmatprep.subr.mxu0 0.0
      %569 = vmatpush2.msra.mxu0 0.0
      %570 = vmatprep.mubr.f32.mxu0 0.0
      %571 = vmatmul.mubr.f32.gmra.mxu0 %v433
      %v572 = vpop.f32.mrf.mxu0
      %v573 = vadd.f32 0.0, %v572
      %v574 = vpop.f32.mrf.mxu0
      %v575 = vadd.f32 0.0, %v574
      %576 = vdwg.mxu0
      %577 = vst [vmem:[%s195] sm:$0xff] 0.0
      %578 = vst [vmem:[%s195 + $0x8] sm:$0xff] %v502
      %579 = vst [vmem:[%s195 + $0x10] sm:$0xff] %v504
      %580 = vst [vmem:[%s195 + $0x18] sm:$0xff] %v573
      %581 = vst [vmem:[%s195 + $0x20] sm:$0xff] %v575
      %v582 = vld [vmem:[%s1] sm:$0xf]
      %v584 = vlaneseq
      %v585 = vshrl.u32 %v584, 7
      %v586 = vsub.s32 0, %v585
      %v587 = vrot.slane %v582, %v586
      %v588 = vlaneseq
      %v589 = vshrl.u32 %v588, 7
      %v590 = vsub.s32 1, %v589
      %v591 = vrot.slane %v582, %v590
      %v592 = vlaneseq
      %v593 = vshrl.u32 %v592, 7
      %v594 = vsub.s32 2, %v593
      %v595 = vrot.slane %v582, %v594
      %v596 = vlaneseq
      %v597 = vshrl.u32 %v596, 7
      %v598 = vsub.s32 3, %v597
      %v599 = vrot.slane %v582, %v598
      %v604 = vmul.f32 %v502, %v587
      %v605 = vmul.f32 %v504, %v591
      %v606 = vmul.f32 %v573, %v595
      %v607 = vmul.f32 %v575, %v599
      %v608 = vadd.f32 %v604, %v605
      %v609 = vadd.f32 %v608, %v606
      %v610 = vadd.f32 %v609, %v607
      %611 = vadd.xlane.f32.xlu0 %v610
      %v612 = vpop.xlane.xlu0 %611
      %v613 = vmul.f32 %v604, %v502
      %v614 = vmul.f32 %v605, %v504
      %v615 = vmul.f32 %v606, %v573
      %v616 = vmul.f32 %v607, %v575
      %v617 = vadd.f32 %v613, %v614
      %v618 = vadd.f32 %v617, %v615
      %v619 = vadd.f32 %v618, %v616
      %620 = vadd.xlane.f32.xlu0 %v619
      %v621 = vpop.xlane.xlu0 %620
      %vm622 = vcmask 7168
      %v623 = vsel %vm622, %v612, %v621
      %p624 = scmp.eq.s32.totalorder %s16, 0
      // Predicated region
      $region33: #{double_conv2d.3} parent=31 // pred_check
        %p625 = pneg %p624
      $region34: #{double_conv2d.3} parent=31 // pred_check_branch
        %627 = sbr.rel (%p625) target = $region36
      $region35: #{double_conv2d.3} parent=31 // pred_region
        %vm628 = vcmask 15360
        %629 = vst.msk [vmem:[%s4] sm:$0xff] %vm628, 0.0
      $region36: #{double_conv2d.3} parent=31 // pred_fallthru
        _
      %v630 = vld [vmem:[%s4] sm:$0xff]
      %v631 = vadd.f32 %v630, %v623
      %vm632 = vcmask 15360
      %633 = vst.msk [vmem:[%s4] sm:$0xff] %vm632, %v631
      %p634 = scmp.lt.s32.totalorder %s16, 1
      %s635 = scalar_select %p634, %s16, 1
      %s636 = smul.addr %s635, 5
      %s637 = smul.addr %s636, 8
      %s638 = scalar_lea.vmem %s3, %s637
      // Predicated region
      $region37: #{double_conv2d.3} parent=31 // pred_check
        %p639 = pneg %p102
      $region38: #{double_conv2d.3} parent=31 // pred_check_branch
        %641 = sbr.rel (%p639) target = $region40
      $region39: #{double_conv2d.3} parent=31 // pred_region
        _
      $region40: #{double_conv2d.3} parent=31 // pred_fallthru
        _
      // Predicated region
      $region41: #{double_conv2d.3} parent=31 // pred_check
        %p642 = pneg %p123
      $region42: #{double_conv2d.3} parent=31 // pred_check_branch
        %644 = sbr.rel (%p642) target = $region44
      $region43: #{double_conv2d.3} parent=31 // pred_region
        _
      $region44: #{double_conv2d.3} parent=31 // pred_fallthru
        _
      // Predicated region
      $region45: #{double_conv2d.3} parent=31 // pred_check
        %p645 = pneg %p123
      $region46: #{double_conv2d.3} parent=31 // pred_check_branch
        %647 = sbr.rel (%p645) target = $region48
      $region47: #{double_conv2d.3} parent=31 // pred_region
        _
      $region48: #{double_conv2d.3} parent=31 // pred_fallthru
        _
    $region32: #{double_conv2d.3} parent=5 // pred_fallthru
      _
    %p648 = scmp.le.s32.totalorder 2, %s11
    // Predicated region
    $region49: #{double_conv2d.3} parent=5 // pred_check
      %p649 = pneg %p648
    $region50: #{double_conv2d.3} parent=5 // pred_check_branch
      %651 = sbr.rel (%p649) target = $region52
    $region51: #{double_conv2d.3} parent=5 // pred_region
      %s652 = ssub.s32 %s11, 2
      // Predicated region
      $region53: #{double_conv2d.3} parent=51 // pred_check
        %p653 = pneg %p108
      $region54: #{double_conv2d.3} parent=51 // pred_check_branch
        %655 = sbr.rel (%p653) target = $region56
      $region55: #{double_conv2d.3} parent=51 // pred_region
        %p656 = scmp.lt.s32.totalorder %s17, 1
        %s657 = scalar_select %p656, %s17, 1
        %s658 = smul.addr %s657, 5
        %s659 = smul.addr %s658, 8
        %s660 = scalar_lea.vmem %s3, %s659
      $region56: #{double_conv2d.3} parent=51 // pred_fallthru
        _
    $region52: #{double_conv2d.3} parent=5 // pred_fallthru
      _
  $region6: #{double_conv2d.3} parent=0 // loop_footer
    %s15 = sadd.s32 1, %s11
  $region7: #{double_conv2d.3} parent=0 // loop_footer_branch
    %10 = sbr.rel target = $region3
  $region8: #{double_conv2d.3} parent=0 // loop_exit
    _

// kernel: double_conv2d.5
$region0: #{double_conv2d.5}
  #allocation0 [shape = 'u32[]', space=smem, size = 0x4, offset = 0x4, fixed_abs, tag = 'smem constant byte address 0x4 - core index']
  #allocation1 [shape = 'u32[144,128]{1,0:T(1,128)}', space=vmem, size = 0x12000, scoped, tag = 'internal scratch']
  %s0 = inlined_call_operand.vmem [shape: f32[2,8,512], index: 0, kind: input, shape index: {}]
  %s1 = inlined_call_operand.vmem [shape: f32[8,1], index: 1, kind: input, shape index: {}]
  %s2 = inlined_call_operand.vmem [shape: f32[8,1], index: 2, kind: input, shape index: {}]
  %s3 = inlined_call_operand.vmem [shape: f32[2,8,256], index: 3, kind: output, shape index: {}]
  %s4 = sld [smem:[#allocation0]]
  $region45: #{double_conv2d.5} parent=0
    _
  %s6 = ssub.s32 1, %s4
  %s7 = scalar_select 0, %s6, %s4
  loop: start=0, step=1, limit=4
  $region2: #{double_conv2d.5} parent=0 // loop_pre_header
    _
  $region3: #{double_conv2d.5} parent=0 // loop_header
    %s9 = sphi 0, %s13
    %p10 = scmp.ge.s32.totalorder %s9, 4
    %s19 = sphi 0, %s21
    %s22 = sphi 0, %s19
    %s23 = sphi 0, %s22
    %s39 = sphi 0, %s23
    %s43 = sphi 0, %s43
    %s45 = sphi 0, %s43
    %s46 = sphi 0, %s45
    %s60 = sphi 0, %s46
    %s64 = sphi 0, %s64
    %s66 = sphi 0, %s64
    %s67 = sphi 0, %s66
    %s81 = sphi 0, %s67
    %s87 = sphi 0, %s89
    %s90 = sphi 0, %s87
    %s91 = sphi 0, %s90
    %s107 = sphi 0, %s91
  $region4: #{double_conv2d.5} parent=0 // loop_header_branch
    %12 = sbr.rel (%p10) target = $region8
  $region5: #{double_conv2d.5} parent=0 // loop_body
    %s14 = ssub.s32 %s9, 1
    %s15 = ssub.s32 %s9, 2
    %s16 = sadd.s32 %s9, 1
    %s17 = ssub.s32 %s9, %s16
    %p18 = scmp.eq.s32.totalorder %s17, 0
    %s20 = sadd.s32 %s19, 1
    %s21 = scalar_select %p18, %s19, %s20
    %p24 = pneg %p18
    %p25 = scmp.eq.s32.totalorder %s9, 1
    %p26 = por %p24, %p25
    %p27 = scmp.ne.s32.totalorder %s19, %s22
    %p28 = scmp.eq.s32.totalorder %s9, 0
    %p29 = por %p27, %p28
    %p30 = scmp.ne.s32.totalorder %s19, %s22
    %p31 = scmp.eq.s32.totalorder %s14, 1
    %p32 = por %p30, %p31
    %p33 = scmp.ne.s32.totalorder %s22, %s23
    %p34 = scmp.eq.s32.totalorder %s14, 0
    %p35 = por %p33, %p34
    %p36 = scmp.ne.s32.totalorder %s22, %s23
    %p37 = scmp.eq.s32.totalorder %s15, 1
    %p38 = por %p36, %p37
    %p40 = scmp.ne.s32.totalorder %s23, %s39
    %p41 = scmp.eq.s32.totalorder %s15, 0
    %p42 = por %p40, %p41
    %s44 = sadd.s32 %s43, 1
    %p47 = scmp.eq.s32.totalorder %s9, 1
    %p48 = scmp.ne.s32.totalorder %s43, %s45
    %p49 = scmp.eq.s32.totalorder %s9, 0
    %p50 = por %p48, %p49
    %p51 = scmp.ne.s32.totalorder %s43, %s45
    %p52 = scmp.eq.s32.totalorder %s14, 1
    %p53 = por %p51, %p52
    %p54 = scmp.ne.s32.totalorder %s45, %s46
    %p55 = scmp.eq.s32.totalorder %s14, 0
    %p56 = por %p54, %p55
    %p57 = scmp.ne.s32.totalorder %s45, %s46
    %p58 = scmp.eq.s32.totalorder %s15, 1
    %p59 = por %p57, %p58
    %p61 = scmp.ne.s32.totalorder %s46, %s60
    %p62 = scmp.eq.s32.totalorder %s15, 0
    %p63 = por %p61, %p62
    %s65 = sadd.s32 %s64, 1
    %p68 = scmp.eq.s32.totalorder %s9, 1
    %p69 = scmp.ne.s32.totalorder %s64, %s66
    %p70 = scmp.eq.s32.totalorder %s9, 0
    %p71 = por %p69, %p70
    %p72 = scmp.ne.s32.totalorder %s64, %s66
    %p73 = scmp.eq.s32.totalorder %s14, 1
    %p74 = por %p72, %p73
    %p75 = scmp.ne.s32.totalorder %s66, %s67
    %p76 = scmp.eq.s32.totalorder %s14, 0
    %p77 = por %p75, %p76
    %p78 = scmp.ne.s32.totalorder %s66, %s67
    %p79 = scmp.eq.s32.totalorder %s15, 1
    %p80 = por %p78, %p79
    %p82 = scmp.ne.s32.totalorder %s67, %s81
    %p83 = scmp.eq.s32.totalorder %s15, 0
    %p84 = por %p82, %p83
    %s85 = ssub.s32 %s9, %s16
    %p86 = scmp.eq.s32.totalorder %s85, 0
    %s88 = sadd.s32 %s87, 1
    %s89 = scalar_select %p86, %s87, %s88
    %p92 = pneg %p86
    %p93 = scmp.eq.s32.totalorder %s9, 1
    %p94 = por %p92, %p93
    %p95 = scmp.ne.s32.totalorder %s87, %s90
    %p96 = scmp.eq.s32.totalorder %s9, 0
    %p97 = por %p95, %p96
    %p98 = scmp.ne.s32.totalorder %s87, %s90
    %p99 = scmp.eq.s32.totalorder %s14, 1
    %p100 = por %p98, %p99
    %p101 = scmp.ne.s32.totalorder %s90, %s91
    %p102 = scmp.eq.s32.totalorder %s14, 0
    %p103 = por %p101, %p102
    %p104 = scmp.ne.s32.totalorder %s90, %s91
    %p105 = scmp.eq.s32.totalorder %s15, 1
    %p106 = por %p104, %p105
    %p108 = scmp.ne.s32.totalorder %s91, %s107
    %p109 = scmp.eq.s32.totalorder %s15, 0
    %p110 = por %p108, %p109
    %p111 = scmp.le.s32.totalorder 1, %s9
    %p112 = scmp.lt.s32.totalorder %s9, 3
    %p113 = pnand %p111, %p112
    %p114 = pneg %p113
    // Predicated region
    $region9: #{double_conv2d.5} parent=5 // pred_check
      _
    $region10: #{double_conv2d.5} parent=5 // pred_check_branch
      %116 = sbr.rel (%p113) target = $region12
    $region11: #{double_conv2d.5} parent=5 // pred_region
      %s117 = ssub.s32 %s9, 1
      // Predicated region
      $region13: #{double_conv2d.5} parent=11 // pred_check
        %p118 = pneg %p56
      $region14: #{double_conv2d.5} parent=11 // pred_check_branch
        %120 = sbr.rel (%p118) target = $region16
      $region15: #{double_conv2d.5} parent=11 // pred_region
        _
      $region16: #{double_conv2d.5} parent=11 // pred_fallthru
        _
      // Predicated region
      $region17: #{double_conv2d.5} parent=11 // pred_check
        %p121 = pneg %p77
      $region18: #{double_conv2d.5} parent=11 // pred_check_branch
        %123 = sbr.rel (%p121) target = $region20
      $region19: #{double_conv2d.5} parent=11 // pred_region
        _
      $region20: #{double_conv2d.5} parent=11 // pred_fallthru
        _
    $region12: #{double_conv2d.5} parent=5 // pred_fallthru
      _
    %p124 = scmp.lt.s32.totalorder %s9, 2
    // Predicated region
    $region21: #{double_conv2d.5} parent=5 // pred_check
      %p125 = pneg %p124
    $region22: #{double_conv2d.5} parent=5 // pred_check_branch
      %127 = sbr.rel (%p125) target = $region24
    $region23: #{double_conv2d.5} parent=5 // pred_region
      // Predicated region
      $region25: #{double_conv2d.5} parent=23 // pred_check
        %p128 = pneg %p29
      $region26: #{double_conv2d.5} parent=23 // pred_check_branch
        %130 = sbr.rel (%p128) target = $region28
      $region27: #{double_conv2d.5} parent=23 // pred_region
        %p131 = scmp.lt.s32.totalorder %s9, 1
        %s132 = scalar_select %p131, %s9, 1
        %s133 = smul.addr %s132, 4
        %s134 = smul.addr %s133, 8
        %s135 = scalar_lea.vmem %s0, %s134
      $region28: #{double_conv2d.5} parent=23 // pred_fallthru
        _
    $region24: #{double_conv2d.5} parent=5 // pred_fallthru
      _
    %p136 = scmp.le.s32.totalorder 1, %s9
    %p137 = scmp.lt.s32.totalorder %s9, 3
    %p138 = pnand %p136, %p137
    %p139 = pneg %p138
    // Predicated region
    $region29: #{double_conv2d.5} parent=5 // pred_check
      _
    $region30: #{double_conv2d.5} parent=5 // pred_check_branch
      %141 = sbr.rel (%p138) target = $region32
    $region31: #{double_conv2d.5} parent=5 // pred_region
      %s142 = ssub.s32 %s9, 1
      %p143 = scmp.lt.s32.totalorder %s14, 1
      %s144 = scalar_select %p143, %s14, 1
      %s145 = smul.addr %s144, 4
      %s146 = smul.addr %s145, 8
      %s147 = scalar_lea.vmem %s0, %s146
      %p148 = pneg %p35
      %p149 = pneg %p32
      %p150 = pneg %p56
      %p151 = pneg %p53
      %p152 = pneg %p77
      %p153 = pneg %p74
      %p154 = pneg %p103
      %p155 = pneg %p100
      %p156 = scmp.lt.s32.totalorder %s14, 1
      %s157 = scalar_select %p156, %s14, 1
      %s158 = smul.addr %s157, 2
      %s159 = smul.addr %s158, 8
      %s160 = scalar_lea.vmem %s3, %s159
      %p161 = scmp.lt.s32.totalorder %s14, 1
      %s162 = scalar_select %p161, %s14, 1
      %s163 = smul.addr %s162, 4
      %s164 = smul.addr %s163, 8
      %s165 = scalar_lea.vmem %s0, %s164
      %p166 = scmp.lt.s32.totalorder %s14, 1
      %s167 = scalar_select %p166, %s14, 1
      %s168 = smul.addr %s167, 2
      %s169 = smul.addr %s168, 8
      %s170 = scalar_lea.vmem %s3, %s169
      %v171 = vld [vmem:[%s165 + $0x8] sm:$0xff]
      %v172 = vld [vmem:[%s165 + $0x10] sm:$0xff]
      %v173 = vld [vmem:[%s165 + $0x18] sm:$0xff]
      %175 = vrot.lane.b32.xlu0 %v171, 126
      %v176 = vpop.permute.xlu0 %175
      %178 = vrot.lane.b32.xlu0 %v171, 124
      %v179 = vpop.permute.xlu0 %178
      %181 = vrot.lane.b32.xlu0 %v171, 122
      %v182 = vpop.permute.xlu0 %181
      %184 = vrot.lane.b32.xlu0 %v171, 120
      %v185 = vpop.permute.xlu0 %184
      %187 = vrot.lane.b32.xlu0 %v171, 118
      %v188 = vpop.permute.xlu0 %187
      %190 = vrot.lane.b32.xlu0 %v171, 116
      %v191 = vpop.permute.xlu0 %190
      %194 = vrot.lane.b32.xlu0 %v171, 114
      %v195 = vpop.permute.xlu0 %194
      %196 = vrot.lane.b32.xlu0 %v172, 114
      %v197 = vpop.permute.xlu0 %196
      %vm198 = vcmask 932864
      %v199 = vsel %vm198, %v195, %v197
      %201 = vrot.lane.b32.xlu0 %v172, 112
      %v202 = vpop.permute.xlu0 %201
      %204 = vrot.lane.b32.xlu0 %v172, 110
      %v205 = vpop.permute.xlu0 %204
      %207 = vrot.lane.b32.xlu0 %v172, 108
      %v208 = vpop.permute.xlu0 %207
      %210 = vrot.lane.b32.xlu0 %v172, 106
      %v211 = vpop.permute.xlu0 %210
      %213 = vrot.lane.b32.xlu0 %v172, 104
      %v214 = vpop.permute.xlu0 %213
      %216 = vrot.lane.b32.xlu0 %v172, 102
      %v217 = vpop.permute.xlu0 %216
      %220 = vrot.lane.b32.xlu0 %v172, 100
      %v221 = vpop.permute.xlu0 %220
      %222 = vrot.lane.b32.xlu0 %v173, 100
      %v223 = vpop.permute.xlu0 %222
      %vm224 = vcmask 818176
      %v225 = vsel %vm224, %v221, %v223
      %227 = vrot.lane.b32.xlu0 %v173, 98
      %v228 = vpop.permute.xlu0 %227
      %vm230 = vcmask 130048
      %v231 = vsel %vm230, %v171, %v176
      %vm232 = vcmask 261120
      %v233 = vsel %vm232, %v231, %v179
      %vm234 = vcmask 392192
      %v235 = vsel %vm234, %v233, %v182
      %vm236 = vcmask 523264
      %v237 = vsel %vm236, %v235, %v185
      %vm238 = vcmask 654336
      %v239 = vsel %vm238, %v237, %v188
      %vm240 = vcmask 785408
      %v241 = vsel %vm240, %v239, %v191
      %vm242 = vcmask 916480
      %v243 = vsel %vm242, %v241, %v199
      %v244 = vsel %vm230, %v202, %v205
      %v245 = vsel %vm232, %v244, %v208
      %v246 = vsel %vm234, %v245, %v211
      %v247 = vsel %vm236, %v246, %v214
      %v248 = vsel %vm238, %v247, %v217
      %v249 = vsel %vm240, %v248, %v225
      %v250 = vsel %vm242, %v249, %v228
      %v251 = vld [vmem:[%s1] sm:$0xff]
      %253 = vset.pattern.permute.xlu0 0
      %254 = vperm.xlu0 %253, %v251
      %v255 = vpop.permute.xlu0 %254
      %v257 = vmul.f32 %v243, %v255
      %v258 = vmul.f32 %v250, %v255
      %v259 = vld [vmem:[%s2] sm:$0xff]
      %261 = vset.pattern.permute.xlu0 0
      %262 = vperm.xlu0 %261, %v259
      %v263 = vpop.permute.xlu0 %262
      %v265 = vadd.f32 %v257, %v263
      %v266 = vadd.f32 %v258, %v263
      %v267 = vmax.f32 %v265, 0.0
      %v268 = vmax.f32 %v266, 0.0
      %269 = vst [vmem:[%s170] sm:$0xff] %v267
      %270 = vst [vmem:[%s170 + $0x8] sm:$0xff] %v268
      %p271 = scmp.lt.s32.totalorder %s14, 1
      %s272 = scalar_select %p271, %s14, 1
      %s273 = smul.addr %s272, 2
      %s274 = smul.addr %s273, 8
      %s275 = scalar_lea.vmem %s3, %s274
      // Predicated region
      $region33: #{double_conv2d.5} parent=31 // pred_check
        %p276 = pneg %p100
      $region34: #{double_conv2d.5} parent=31 // pred_check_branch
        %278 = sbr.rel (%p276) target = $region36
      $region35: #{double_conv2d.5} parent=31 // pred_region
        _
      $region36: #{double_conv2d.5} parent=31 // pred_fallthru
        _
    $region32: #{double_conv2d.5} parent=5 // pred_fallthru
      _
    %p279 = scmp.le.s32.totalorder 2, %s9
    // Predicated region
    $region37: #{double_conv2d.5} parent=5 // pred_check
      %p280 = pneg %p279
    $region38: #{double_conv2d.5} parent=5 // pred_check_branch
      %282 = sbr.rel (%p280) target = $region40
    $region39: #{double_conv2d.5} parent=5 // pred_region
      %s283 = ssub.s32 %s9, 2
      // Predicated region
      $region41: #{double_conv2d.5} parent=39 // pred_check
        %p284 = pneg %p106
      $region42: #{double_conv2d.5} parent=39 // pred_check_branch
        %286 = sbr.rel (%p284) target = $region44
      $region43: #{double_conv2d.5} parent=39 // pred_region
        %p287 = scmp.lt.s32.totalorder %s15, 1
        %s288 = scalar_select %p287, %s15, 1
        %s289 = smul.addr %s288, 2
        %s290 = smul.addr %s289, 8
        %s291 = scalar_lea.vmem %s3, %s290
      $region44: #{double_conv2d.5} parent=39 // pred_fallthru
        _
    $region40: #{double_conv2d.5} parent=5 // pred_fallthru
      _
  $region6: #{double_conv2d.5} parent=0 // loop_footer
    %s13 = sadd.s32 1, %s9
  $region7: #{double_conv2d.5} parent=0 // loop_footer_branch
    %8 = sbr.rel target = $region3
  $region8: #{double_conv2d.5} parent=0 // loop_exit
    _

// kernel: double_conv2d.4
$region0: #{double_conv2d.4}
  #allocation0 [shape = 'u32[]', space=smem, size = 0x4, offset = 0x4, fixed_abs, tag = 'smem constant byte address 0x4 - core index']
  #allocation1 [shape = 'u32[144,128]{1,0:T(1,128)}', space=vmem, size = 0x12000, scoped, tag = 'internal scratch']
  #allocation2 [shape = 'f32[72,384]{1,0:T(8,128)}', space=vmem, size = 0x1b000, scoped, tag = 'scratch operand']
  %s0 = inlined_call_operand.vmem [shape: f32[2,8,640], index: 0, kind: input, shape index: {}]
  %s1 = inlined_call_operand.vmem [shape: f32[8,1], index: 1, kind: input, shape index: {}]
  %s2 = inlined_call_operand.vmem [shape: f32[8,1], index: 2, kind: input, shape index: {}]
  %s3 = inlined_call_operand.vmem [shape: f32[1,640], index: 3, kind: input, shape index: {}]
  %s4 = inlined_call_operand.vmem [shape: f32[1,384], index: 4, kind: input, shape index: {}]
  %s5 = inlined_call_operand.vmem [shape: f32[8,72], index: 5, kind: input, shape index: {}]
  %s6 = inlined_call_operand.vmem [shape: f32[2,8,512], index: 6, kind: output, shape index: {0}]
  %s7 = inlined_call_operand.vmem [shape: f32[8,2], index: 7, kind: output, shape index: {1}]
  %8 = xla_tuple %s6, %s7
  %s9 = sld [smem:[#allocation0]]
  $region69: #{double_conv2d.4} parent=0
    _
  %s11 = ssub.s32 1, %s9
  %s12 = scalar_select 0, %s11, %s9
  loop: start=0, step=1, limit=4
  $region2: #{double_conv2d.4} parent=0 // loop_pre_header
    _
  $region3: #{double_conv2d.4} parent=0 // loop_header
    %s14 = sphi 0, %s18
    %p15 = scmp.ge.s32.totalorder %s14, 4
    %s24 = sphi 0, %s26
    %s27 = sphi 0, %s24
    %s28 = sphi 0, %s27
    %s44 = sphi 0, %s28
    %s48 = sphi 0, %s48
    %s50 = sphi 0, %s48
    %s51 = sphi 0, %s50
    %s65 = sphi 0, %s51
    %s69 = sphi 0, %s69
    %s71 = sphi 0, %s69
    %s72 = sphi 0, %s71
    %s86 = sphi 0, %s72
    %s90 = sphi 0, %s90
    %s92 = sphi 0, %s90
    %s93 = sphi 0, %s92
    %s107 = sphi 0, %s93
    %s111 = sphi 0, %s111
    %s113 = sphi 0, %s111
    %s114 = sphi 0, %s113
    %s128 = sphi 0, %s114
    %s132 = sphi 0, %s132
    %s134 = sphi 0, %s132
    %s135 = sphi 0, %s134
    %s149 = sphi 0, %s135
    %s155 = sphi 0, %s157
    %s158 = sphi 0, %s155
    %s159 = sphi 0, %s158
    %s175 = sphi 0, %s159
    %s179 = sphi 0, %s179
    %s181 = sphi 0, %s179
    %s182 = sphi 0, %s181
    %s196 = sphi 0, %s182
  $region4: #{double_conv2d.4} parent=0 // loop_header_branch
    %17 = sbr.rel (%p15) target = $region8
  $region5: #{double_conv2d.4} parent=0 // loop_body
    %s19 = ssub.s32 %s14, 1
    %s20 = ssub.s32 %s14, 2
    %s21 = sadd.s32 %s14, 1
    %s22 = ssub.s32 %s14, %s21
    %p23 = scmp.eq.s32.totalorder %s22, 0
    %s25 = sadd.s32 %s24, 1
    %s26 = scalar_select %p23, %s24, %s25
    %p29 = pneg %p23
    %p30 = scmp.eq.s32.totalorder %s14, 1
    %p31 = por %p29, %p30
    %p32 = scmp.ne.s32.totalorder %s24, %s27
    %p33 = scmp.eq.s32.totalorder %s14, 0
    %p34 = por %p32, %p33
    %p35 = scmp.ne.s32.totalorder %s24, %s27
    %p36 = scmp.eq.s32.totalorder %s19, 1
    %p37 = por %p35, %p36
    %p38 = scmp.ne.s32.totalorder %s27, %s28
    %p39 = scmp.eq.s32.totalorder %s19, 0
    %p40 = por %p38, %p39
    %p41 = scmp.ne.s32.totalorder %s27, %s28
    %p42 = scmp.eq.s32.totalorder %s20, 1
    %p43 = por %p41, %p42
    %p45 = scmp.ne.s32.totalorder %s28, %s44
    %p46 = scmp.eq.s32.totalorder %s20, 0
    %p47 = por %p45, %p46
    %s49 = sadd.s32 %s48, 1
    %p52 = scmp.eq.s32.totalorder %s14, 1
    %p53 = scmp.ne.s32.totalorder %s48, %s50
    %p54 = scmp.eq.s32.totalorder %s14, 0
    %p55 = por %p53, %p54
    %p56 = scmp.ne.s32.totalorder %s48, %s50
    %p57 = scmp.eq.s32.totalorder %s19, 1
    %p58 = por %p56, %p57
    %p59 = scmp.ne.s32.totalorder %s50, %s51
    %p60 = scmp.eq.s32.totalorder %s19, 0
    %p61 = por %p59, %p60
    %p62 = scmp.ne.s32.totalorder %s50, %s51
    %p63 = scmp.eq.s32.totalorder %s20, 1
    %p64 = por %p62, %p63
    %p66 = scmp.ne.s32.totalorder %s51, %s65
    %p67 = scmp.eq.s32.totalorder %s20, 0
    %p68 = por %p66, %p67
    %s70 = sadd.s32 %s69, 1
    %p73 = scmp.eq.s32.totalorder %s14, 1
    %p74 = scmp.ne.s32.totalorder %s69, %s71
    %p75 = scmp.eq.s32.totalorder %s14, 0
    %p76 = por %p74, %p75
    %p77 = scmp.ne.s32.totalorder %s69, %s71
    %p78 = scmp.eq.s32.totalorder %s19, 1
    %p79 = por %p77, %p78
    %p80 = scmp.ne.s32.totalorder %s71, %s72
    %p81 = scmp.eq.s32.totalorder %s19, 0
    %p82 = por %p80, %p81
    %p83 = scmp.ne.s32.totalorder %s71, %s72
    %p84 = scmp.eq.s32.totalorder %s20, 1
    %p85 = por %p83, %p84
    %p87 = scmp.ne.s32.totalorder %s72, %s86
    %p88 = scmp.eq.s32.totalorder %s20, 0
    %p89 = por %p87, %p88
    %s91 = sadd.s32 %s90, 1
    %p94 = scmp.eq.s32.totalorder %s14, 1
    %p95 = scmp.ne.s32.totalorder %s90, %s92
    %p96 = scmp.eq.s32.totalorder %s14, 0
    %p97 = por %p95, %p96
    %p98 = scmp.ne.s32.totalorder %s90, %s92
    %p99 = scmp.eq.s32.totalorder %s19, 1
    %p100 = por %p98, %p99
    %p101 = scmp.ne.s32.totalorder %s92, %s93
    %p102 = scmp.eq.s32.totalorder %s19, 0
    %p103 = por %p101, %p102
    %p104 = scmp.ne.s32.totalorder %s92, %s93
    %p105 = scmp.eq.s32.totalorder %s20, 1
    %p106 = por %p104, %p105
    %p108 = scmp.ne.s32.totalorder %s93, %s107
    %p109 = scmp.eq.s32.totalorder %s20, 0
    %p110 = por %p108, %p109
    %s112 = sadd.s32 %s111, 1
    %p115 = scmp.eq.s32.totalorder %s14, 1
    %p116 = scmp.ne.s32.totalorder %s111, %s113
    %p117 = scmp.eq.s32.totalorder %s14, 0
    %p118 = por %p116, %p117
    %p119 = scmp.ne.s32.totalorder %s111, %s113
    %p120 = scmp.eq.s32.totalorder %s19, 1
    %p121 = por %p119, %p120
    %p122 = scmp.ne.s32.totalorder %s113, %s114
    %p123 = scmp.eq.s32.totalorder %s19, 0
    %p124 = por %p122, %p123
    %p125 = scmp.ne.s32.totalorder %s113, %s114
    %p126 = scmp.eq.s32.totalorder %s20, 1
    %p127 = por %p125, %p126
    %p129 = scmp.ne.s32.totalorder %s114, %s128
    %p130 = scmp.eq.s32.totalorder %s20, 0
    %p131 = por %p129, %p130
    %s133 = sadd.s32 %s132, 1
    %p136 = scmp.eq.s32.totalorder %s14, 1
    %p137 = scmp.ne.s32.totalorder %s132, %s134
    %p138 = scmp.eq.s32.totalorder %s14, 0
    %p139 = por %p137, %p138
    %p140 = scmp.ne.s32.totalorder %s132, %s134
    %p141 = scmp.eq.s32.totalorder %s19, 1
    %p142 = por %p140, %p141
    %p143 = scmp.ne.s32.totalorder %s134, %s135
    %p144 = scmp.eq.s32.totalorder %s19, 0
    %p145 = por %p143, %p144
    %p146 = scmp.ne.s32.totalorder %s134, %s135
    %p147 = scmp.eq.s32.totalorder %s20, 1
    %p148 = por %p146, %p147
    %p150 = scmp.ne.s32.totalorder %s135, %s149
    %p151 = scmp.eq.s32.totalorder %s20, 0
    %p152 = por %p150, %p151
    %s153 = ssub.s32 %s14, %s21
    %p154 = scmp.eq.s32.totalorder %s153, 0
    %s156 = sadd.s32 %s155, 1
    %s157 = scalar_select %p154, %s155, %s156
    %p160 = pneg %p154
    %p161 = scmp.eq.s32.totalorder %s14, 1
    %p162 = por %p160, %p161
    %p163 = scmp.ne.s32.totalorder %s155, %s158
    %p164 = scmp.eq.s32.totalorder %s14, 0
    %p165 = por %p163, %p164
    %p166 = scmp.ne.s32.totalorder %s155, %s158
    %p167 = scmp.eq.s32.totalorder %s19, 1
    %p168 = por %p166, %p167
    %p169 = scmp.ne.s32.totalorder %s158, %s159
    %p170 = scmp.eq.s32.totalorder %s19, 0
    %p171 = por %p169, %p170
    %p172 = scmp.ne.s32.totalorder %s158, %s159
    %p173 = scmp.eq.s32.totalorder %s20, 1
    %p174 = por %p172, %p173
    %p176 = scmp.ne.s32.totalorder %s159, %s175
    %p177 = scmp.eq.s32.totalorder %s20, 0
    %p178 = por %p176, %p177
    %s180 = sadd.s32 %s179, 1
    %p183 = scmp.eq.s32.totalorder %s14, 1
    %p184 = scmp.ne.s32.totalorder %s179, %s181
    %p185 = scmp.eq.s32.totalorder %s14, 0
    %p186 = por %p184, %p185
    %p187 = scmp.ne.s32.totalorder %s179, %s181
    %p188 = scmp.eq.s32.totalorder %s19, 1
    %p189 = por %p187, %p188
    %p190 = scmp.ne.s32.totalorder %s181, %s182
    %p191 = scmp.eq.s32.totalorder %s19, 0
    %p192 = por %p190, %p191
    %p193 = scmp.ne.s32.totalorder %s181, %s182
    %p194 = scmp.eq.s32.totalorder %s20, 1
    %p195 = por %p193, %p194
    %p197 = scmp.ne.s32.totalorder %s182, %s196
    %p198 = scmp.eq.s32.totalorder %s20, 0
    %p199 = por %p197, %p198
    %p200 = scmp.le.s32.totalorder 1, %s14
    %p201 = scmp.lt.s32.totalorder %s14, 3
    %p202 = pnand %p200, %p201
    %p203 = pneg %p202
    // Predicated region
    $region9: #{double_conv2d.4} parent=5 // pred_check
      _
    $region10: #{double_conv2d.4} parent=5 // pred_check_branch
      %205 = sbr.rel (%p202) target = $region12
    $region11: #{double_conv2d.4} parent=5 // pred_region
      %s206 = ssub.s32 %s14, 1
      // Predicated region
      $region13: #{double_conv2d.4} parent=11 // pred_check
        %p207 = pneg %p61
      $region14: #{double_conv2d.4} parent=11 // pred_check_branch
        %209 = sbr.rel (%p207) target = $region16
      $region15: #{double_conv2d.4} parent=11 // pred_region
        _
      $region16: #{double_conv2d.4} parent=11 // pred_fallthru
        _
      // Predicated region
      $region17: #{double_conv2d.4} parent=11 // pred_check
        %p210 = pneg %p82
      $region18: #{double_conv2d.4} parent=11 // pred_check_branch
        %212 = sbr.rel (%p210) target = $region20
      $region19: #{double_conv2d.4} parent=11 // pred_region
        _
      $region20: #{double_conv2d.4} parent=11 // pred_fallthru
        _
      // Predicated region
      $region21: #{double_conv2d.4} parent=11 // pred_check
        %p213 = pneg %p103
      $region22: #{double_conv2d.4} parent=11 // pred_check_branch
        %215 = sbr.rel (%p213) target = $region24
      $region23: #{double_conv2d.4} parent=11 // pred_region
        _
      $region24: #{double_conv2d.4} parent=11 // pred_fallthru
        _
      // Predicated region
      $region25: #{double_conv2d.4} parent=11 // pred_check
        %p216 = pneg %p124
      $region26: #{double_conv2d.4} parent=11 // pred_check_branch
        %218 = sbr.rel (%p216) target = $region28
      $region27: #{double_conv2d.4} parent=11 // pred_region
        _
      $region28: #{double_conv2d.4} parent=11 // pred_fallthru
        _
      // Predicated region
      $region29: #{double_conv2d.4} parent=11 // pred_check
        %p219 = pneg %p145
      $region30: #{double_conv2d.4} parent=11 // pred_check_branch
        %221 = sbr.rel (%p219) target = $region32
      $region31: #{double_conv2d.4} parent=11 // pred_region
        _
      $region32: #{double_conv2d.4} parent=11 // pred_fallthru
        _
    $region12: #{double_conv2d.4} parent=5 // pred_fallthru
      _
    %p222 = scmp.lt.s32.totalorder %s14, 2
    // Predicated region
    $region33: #{double_conv2d.4} parent=5 // pred_check
      %p223 = pneg %p222
    $region34: #{double_conv2d.4} parent=5 // pred_check_branch
      %225 = sbr.rel (%p223) target = $region36
    $region35: #{double_conv2d.4} parent=5 // pred_region
      // Predicated region
      $region37: #{double_conv2d.4} parent=35 // pred_check
        %p226 = pneg %p34
      $region38: #{double_conv2d.4} parent=35 // pred_check_branch
        %228 = sbr.rel (%p226) target = $region40
      $region39: #{double_conv2d.4} parent=35 // pred_region
        %p229 = scmp.lt.s32.totalorder %s14, 1
        %s230 = scalar_select %p229, %s14, 1
        %s231 = smul.addr %s230, 5
        %s232 = smul.addr %s231, 8
        %s233 = scalar_lea.vmem %s0, %s232
      $region40: #{double_conv2d.4} parent=35 // pred_fallthru
        _
    $region36: #{double_conv2d.4} parent=5 // pred_fallthru
      _
    %p234 = scmp.le.s32.totalorder 1, %s14
    %p235 = scmp.lt.s32.totalorder %s14, 3
    %p236 = pnand %p234, %p235
    %p237 = pneg %p236
    // Predicated region
    $region41: #{double_conv2d.4} parent=5 // pred_check
      _
    $region42: #{double_conv2d.4} parent=5 // pred_check_branch
      %239 = sbr.rel (%p236) target = $region44
    $region43: #{double_conv2d.4} parent=5 // pred_region
      %s240 = ssub.s32 %s14, 1
      %p241 = scmp.lt.s32.totalorder %s19, 1
      %s242 = scalar_select %p241, %s19, 1
      %s243 = smul.addr %s242, 5
      %s244 = smul.addr %s243, 8
      %s245 = scalar_lea.vmem %s0, %s244
      %p246 = pneg %p40
      %p247 = pneg %p37
      %p248 = pneg %p61
      %p249 = pneg %p58
      %p250 = pneg %p82
      %p251 = pneg %p79
      %p252 = pneg %p103
      %p253 = pneg %p100
      %p254 = pneg %p124
      %p255 = pneg %p121
      %p256 = pneg %p145
      %p257 = pneg %p142
      %p258 = pneg %p171
      %p259 = pneg %p168
      %p260 = scmp.lt.s32.totalorder %s19, 1
      %s261 = scalar_select %p260, %s19, 1
      %s262 = smul.addr %s261, 4
      %s263 = smul.addr %s262, 8
      %s264 = scalar_lea.vmem %s6, %s263
      %p265 = pneg %p192
      %p266 = pneg %p189
      %p267 = scmp.lt.s32.totalorder %s19, 1
      %s268 = scalar_select %p267, %s19, 1
      %s269 = smul.addr %s268, 5
      %s270 = smul.addr %s269, 8
      %s271 = scalar_lea.vmem %s0, %s270
      %p272 = scmp.lt.s32.totalorder %s19, 1
      %s273 = scalar_select %p272, %s19, 1
      %s274 = smul.addr %s273, 4
      %s275 = smul.addr %s274, 8
      %s276 = scalar_lea.vmem %s6, %s275
      %v277 = vld [vmem:[%s271] sm:$0xff]
      %v278 = vld [vmem:[%s271 + $0x8] sm:$0xff]
      %v279 = vld [vmem:[%s271 + $0x10] sm:$0xff]
      %v280 = vld [vmem:[%s271 + $0x18] sm:$0xff]
      %v281 = vld [vmem:[%s271 + $0x20] sm:$0xff]
      %v282 = vld [vmem:[%s1] sm:$0xff]
      %284 = vset.pattern.permute.xlu0 0
      %285 = vperm.xlu0 %284, %v282
      %v286 = vpop.permute.xlu0 %285
      %v288 = vmul.f32 %v277, %v286
      %v289 = vmul.f32 %v278, %v286
      %v290 = vmul.f32 %v279, %v286
      %v291 = vmul.f32 %v280, %v286
      %v292 = vmul.f32 %v281, %v286
      %v293 = vld [vmem:[%s2] sm:$0xff]
      %295 = vset.pattern.permute.xlu0 0
      %296 = vperm.xlu0 %295, %v293
      %v297 = vpop.permute.xlu0 %296
      %v299 = vadd.f32 %v288, %v297
      %v300 = vadd.f32 %v289, %v297
      %v301 = vadd.f32 %v290, %v297
      %v302 = vadd.f32 %v291, %v297
      %v303 = vadd.f32 %v292, %v297
      %v304 = vmax.f32 %v299, 0.0
      %v305 = vmax.f32 %v300, 0.0
      %v306 = vmax.f32 %v301, 0.0
      %v307 = vmax.f32 %v302, 0.0
      %v308 = vmax.f32 %v303, 0.0
      %v309 = vld [vmem:[%s3] sm:$0x1f]
      %v311 = vlaneseq
      %v312 = vshrl.u32 %v311, 7
      %v313 = vsub.s32 0, %v312
      %v314 = vrot.slane %v309, %v313
      %v315 = vlaneseq
      %v316 = vshrl.u32 %v315, 7
      %v317 = vsub.s32 1, %v316
      %v318 = vrot.slane %v309, %v317
      %v319 = vlaneseq
      %v320 = vshrl.u32 %v319, 7
      %v321 = vsub.s32 2, %v320
      %v322 = vrot.slane %v309, %v321
      %v323 = vlaneseq
      %v324 = vshrl.u32 %v323, 7
      %v325 = vsub.s32 3, %v324
      %v326 = vrot.slane %v309, %v325
      %v327 = vlaneseq
      %v328 = vshrl.u32 %v327, 7
      %v329 = vsub.s32 4, %v328
      %v330 = vrot.slane %v309, %v329
      %v336 = vmul.f32 %v304, %v314
      %v337 = vmul.f32 %v305, %v318
      %v338 = vmul.f32 %v306, %v322
      %v339 = vmul.f32 %v307, %v326
      %v340 = vmul.f32 %v308, %v330
      %345 = vrot.lane.b32.xlu0 %v336, 19
      %v346 = vpop.permute.xlu0 %345
      %347 = vrot.lane.b32.xlu0 %v337, 19
      %v348 = vpop.permute.xlu0 %347
      %349 = vrot.lane.b32.xlu0 %v338, 19
      %v350 = vpop.permute.xlu0 %349
      %351 = vrot.lane.b32.xlu0 %v339, 19
      %v352 = vpop.permute.xlu0 %351
      %vm353 = vcmask 154624
      %v354 = vsel %vm353, %v346, %v348
      %v355 = vsel %vm353, %v348, %v350
      %v356 = vsel %vm353, %v350, %v352
      %360 = vst [vmem:[#allocation2] sm:$0xff] %v354
      %361 = vst [vmem:[#allocation2 + $0x8] sm:$0xff] %v355
      %362 = vst [vmem:[#allocation2 + $0x10] sm:$0xff] %v356
      %363 = vrot.lane.b32.xlu0 %v336, 18
      %v364 = vpop.permute.xlu0 %363
      %365 = vrot.lane.b32.xlu0 %v337, 18
      %v366 = vpop.permute.xlu0 %365
      %367 = vrot.lane.b32.xlu0 %v338, 18
      %v368 = vpop.permute.xlu0 %367
      %369 = vrot.lane.b32.xlu0 %v339, 18
      %v370 = vpop.permute.xlu0 %369
      %vm371 = vcmask 146432
      %v372 = vsel %vm371, %v364, %v366
      %v373 = vsel %vm371, %v366, %v368
      %v374 = vsel %vm371, %v368, %v370
      %378 = vst [vmem:[#allocation2 + $0x18] sm:$0xff] %v372
      %379 = vst [vmem:[#allocation2 + $0x20] sm:$0xff] %v373
      %380 = vst [vmem:[#allocation2 + $0x28] sm:$0xff] %v374
      %381 = vrot.lane.b32.xlu0 %v336, 17
      %v382 = vpop.permute.xlu0 %381
      %383 = vrot.lane.b32.xlu0 %v337, 17
      %v384 = vpop.permute.xlu0 %383
      %385 = vrot.lane.b32.xlu0 %v338, 17
      %v386 = vpop.permute.xlu0 %385
      %387 = vrot.lane.b32.xlu0 %v339, 17
      %v388 = vpop.permute.xlu0 %387
      %vm389 = vcmask 138240
      %v390 = vsel %vm389, %v382, %v384
      %v391 = vsel %vm389, %v384, %v386
      %v392 = vsel %vm389, %v386, %v388
      %396 = vst [vmem:[#allocation2 + $0x30] sm:$0xff] %v390
      %397 = vst [vmem:[#allocation2 + $0x38] sm:$0xff] %v391
      %398 = vst [vmem:[#allocation2 + $0x40] sm:$0xff] %v392
      %399 = vrot.lane.b32.xlu0 %v336, 1
      %v400 = vpop.permute.xlu0 %399
      %401 = vrot.lane.b32.xlu0 %v337, 1
      %v402 = vpop.permute.xlu0 %401
      %403 = vrot.lane.b32.xlu0 %v338, 1
      %v404 = vpop.permute.xlu0 %403
      %405 = vrot.lane.b32.xlu0 %v339, 1
      %v406 = vpop.permute.xlu0 %405
      %vm407 = vcmask 7168
      %v408 = vsel %vm407, %v400, %v402
      %v409 = vsel %vm407, %v402, %v404
      %v410 = vsel %vm407, %v404, %v406
      %414 = vst [vmem:[#allocation2 + $0x48] sm:$0xff] %v408
      %415 = vst [vmem:[#allocation2 + $0x50] sm:$0xff] %v409
      %416 = vst [vmem:[#allocation2 + $0x58] sm:$0xff] %v410
      %417 = vst [vmem:[#allocation2 + $0x60] sm:$0xff] %v337
      %418 = vst [vmem:[#allocation2 + $0x68] sm:$0xff] %v338
      %419 = vst [vmem:[#allocation2 + $0x70] sm:$0xff] %v339
      %421 = vrot.lane.b32.xlu0 %v337, 127
      %v422 = vpop.permute.xlu0 %421
      %423 = vrot.lane.b32.xlu0 %v338, 127
      %v424 = vpop.permute.xlu0 %423
      %425 = vrot.lane.b32.xlu0 %v339, 127
      %v426 = vpop.permute.xlu0 %425
      %427 = vrot.lane.b32.xlu0 %v340, 127
      %v428 = vpop.permute.xlu0 %427
      %vm429 = vcmask 1039360
      %v430 = vsel %vm429, %v422, %v424
      %v431 = vsel %vm429, %v424, %v426
      %v432 = vsel %vm429, %v426, %v428
      %436 = vst [vmem:[#allocation2 + $0x78] sm:$0xff] %v430
      %437 = vst [vmem:[#allocation2 + $0x80] sm:$0xff] %v431
      %438 = vst [vmem:[#allocation2 + $0x88] sm:$0xff] %v432
      %439 = vrot.lane.b32.xlu0 %v337, 111
      %v440 = vpop.permute.xlu0 %439
      %441 = vrot.lane.b32.xlu0 %v338, 111
      %v442 = vpop.permute.xlu0 %441
      %443 = vrot.lane.b32.xlu0 %v339, 111
      %v444 = vpop.permute.xlu0 %443
      %445 = vrot.lane.b32.xlu0 %v340, 111
      %v446 = vpop.permute.xlu0 %445
      %vm447 = vcmask 908288
      %v448 = vsel %vm447, %v440, %v442
      %v449 = vsel %vm447, %v442, %v444
      %v450 = vsel %vm447, %v444, %v446
      %454 = vst [vmem:[#allocation2 + $0x90] sm:$0xff] %v448
      %455 = vst [vmem:[#allocation2 + $0x98] sm:$0xff] %v449
      %456 = vst [vmem:[#allocation2 + $0xa0] sm:$0xff] %v450
      %457 = vrot.lane.b32.xlu0 %v337, 110
      %v458 = vpop.permute.xlu0 %457
      %459 = vrot.lane.b32.xlu0 %v338, 110
      %v460 = vpop.permute.xlu0 %459
      %461 = vrot.lane.b32.xlu0 %v339, 110
      %v462 = vpop.permute.xlu0 %461
      %463 = vrot.lane.b32.xlu0 %v340, 110
      %v464 = vpop.permute.xlu0 %463
      %vm465 = vcmask 900096
      %v466 = vsel %vm465, %v458, %v460
      %v467 = vsel %vm465, %v460, %v462
      %v468 = vsel %vm465, %v462, %v464
      %472 = vst [vmem:[#allocation2 + $0xa8] sm:$0xff] %v466
      %473 = vst [vmem:[#allocation2 + $0xb0] sm:$0xff] %v467
      %474 = vst [vmem:[#allocation2 + $0xb8] sm:$0xff] %v468
      %475 = vrot.lane.b32.xlu0 %v337, 109
      %v476 = vpop.permute.xlu0 %475
      %477 = vrot.lane.b32.xlu0 %v338, 109
      %v478 = vpop.permute.xlu0 %477
      %479 = vrot.lane.b32.xlu0 %v339, 109
      %v480 = vpop.permute.xlu0 %479
      %481 = vrot.lane.b32.xlu0 %v340, 109
      %v482 = vpop.permute.xlu0 %481
      %vm483 = vcmask 891904
      %v484 = vsel %vm483, %v476, %v478
      %v485 = vsel %vm483, %v478, %v480
      %v486 = vsel %vm483, %v480, %v482
      %490 = vst [vmem:[#allocation2 + $0xc0] sm:$0xff] %v484
      %491 = vst [vmem:[#allocation2 + $0xc8] sm:$0xff] %v485
      %492 = vst [vmem:[#allocation2 + $0xd0] sm:$0xff] %v486
      %v493 = vld [vmem:[%s5] sm:$0xff]
      %v494 = vld [vmem:[#allocation2] sm:$0xff]
      %v495 = vld [vmem:[#allocation2 + $0x8] sm:$0xff]
      %v496 = vld [vmem:[#allocation2 + $0x10] sm:$0xff]
      %v497 = vld [vmem:[#allocation2 + $0x18] sm:$0xff]
      %v498 = vld [vmem:[#allocation2 + $0x20] sm:$0xff]
      %v499 = vld [vmem:[#allocation2 + $0x28] sm:$0xff]
      %v500 = vld [vmem:[#allocation2 + $0x30] sm:$0xff]
      %v501 = vld [vmem:[#allocation2 + $0x38] sm:$0xff]
      %v502 = vld [vmem:[#allocation2 + $0x40] sm:$0xff]
      %v503 = vld [vmem:[#allocation2 + $0x48] sm:$0xff]
      %v504 = vld [vmem:[#allocation2 + $0x50] sm:$0xff]
      %v505 = vld [vmem:[#allocation2 + $0x58] sm:$0xff]
      %v506 = vld [vmem:[#allocation2 + $0x60] sm:$0xff]
      %v507 = vld [vmem:[#allocation2 + $0x68] sm:$0xff]
      %v508 = vld [vmem:[#allocation2 + $0x70] sm:$0xff]
      %v509 = vld [vmem:[#allocation2 + $0x78] sm:$0xff]
      %v510 = vld [vmem:[#allocation2 + $0x80] sm:$0xff]
      %v511 = vld [vmem:[#allocation2 + $0x88] sm:$0xff]
      %v512 = vld [vmem:[#allocation2 + $0x90] sm:$0xff]
      %v513 = vld [vmem:[#allocation2 + $0x98] sm:$0xff]
      %v514 = vld [vmem:[#allocation2 + $0xa0] sm:$0xff]
      %v515 = vld [vmem:[#allocation2 + $0xa8] sm:$0xff]
      %v516 = vld [vmem:[#allocation2 + $0xb0] sm:$0xff]
      %v517 = vld [vmem:[#allocation2 + $0xb8] sm:$0xff]
      %v518 = vld [vmem:[#allocation2 + $0xc0] sm:$0xff]
      %v519 = vld [vmem:[#allocation2 + $0xc8] sm:$0xff]
      %v520 = vld [vmem:[#allocation2 + $0xd0] sm:$0xff]
      %vm521 = vcmask 588800
      %v523 = vsel %vm521, %v493, 0
      %525 = vmatprep.subr.mxu0 0.0
      %526 = vmatpush1.msra.mxu0 0.0
      %527 = vmatprep.subr.mxu0 0.0
      %528 = vmatpush1.msra.mxu0 0.0
      %529 = vmatprep.subr.mxu0 0.0
      %530 = vmatpush1.msra.mxu0 0.0
      %531 = vmatprep.subr.mxu0 0.0
      %532 = vmatpush1.msra.mxu0 0.0
      %533 = vmatprep.subr.mxu0 0.0
      %534 = vmatpush1.msra.mxu0 0.0
      %535 = vmatprep.subr.mxu0 0.0
      %536 = vmatpush1.msra.mxu0 0.0
      %537 = vmatprep.subr.mxu0 0.0
      %538 = vmatpush1.msra.mxu0 0.0
      %539 = vmatprep.subr.mxu0 %v519
      %540 = vmatpush1.msra.mxu0 %v518
      %541 = vmatprep.subr.mxu0 %v516
      %542 = vmatpush1.msra.mxu0 %v515
      %543 = vmatprep.subr.mxu0 %v513
      %544 = vmatpush1.msra.mxu0 %v512
      %545 = vmatprep.subr.mxu0 %v510
      %546 = vmatpush1.msra.mxu0 %v509
      %547 = vmatprep.subr.mxu0 %v507
      %548 = vmatpush1.msra.mxu0 %v506
      %549 = vmatprep.subr.mxu0 %v504
      %550 = vmatpush1.msra.mxu0 %v503
      %551 = vmatprep.subr.mxu0 %v501
      %552 = vmatpush1.msra.mxu0 %v500
      %553 = vmatprep.subr.mxu0 %v498
      %554 = vmatpush1.msra.mxu0 %v497
      %555 = vmatprep.subr.mxu0 %v495
      %556 = vmatpush1.msra.mxu0 %v494
      %557 = vmatprep.subr.mxu0 0.0
      %558 = vmatpush2.msra.mxu0 0.0
      %559 = vmatprep.subr.mxu0 0.0
      %560 = vmatpush2.msra.mxu0 0.0
      %561 = vmatprep.subr.mxu0 0.0
      %562 = vmatpush2.msra.mxu0 0.0
      %563 = vmatprep.subr.mxu0 0.0
      %564 = vmatpush2.msra.mxu0 0.0
      %565 = vmatprep.subr.mxu0 0.0
      %566 = vmatpush2.msra.mxu0 0.0
      %567 = vmatprep.subr.mxu0 0.0
      %568 = vmatpush2.msra.mxu0 0.0
      %569 = vmatprep.subr.mxu0 0.0
      %570 = vmatpush2.msra.mxu0 0.0
      %571 = vmatprep.subr.mxu0 0.0
      %572 = vmatpush2.msra.mxu0 0.0
      %573 = vmatprep.subr.mxu0 0.0
      %574 = vmatpush2.msra.mxu0 0.0
      %575 = vmatprep.subr.mxu0 0.0
      %576 = vmatpush2.msra.mxu0 0.0
      %577 = vmatprep.subr.mxu0 0.0
      %578 = vmatpush2.msra.mxu0 0.0
      %579 = vmatprep.subr.mxu0 0.0
      %580 = vmatpush2.msra.mxu0 0.0
      %581 = vmatprep.subr.mxu0 0.0
      %582 = vmatpush2.msra.mxu0 0.0
      %583 = vmatprep.subr.mxu0 0.0
      %584 = vmatpush2.msra.mxu0 0.0
      %585 = vmatprep.subr.mxu0 0.0
      %586 = vmatpush2.msra.mxu0 0.0
      %587 = vmatprep.subr.mxu0 0.0
      %588 = vmatpush2.msra.mxu0 0.0
      %589 = vmatprep.mubr.f32.mxu0 0.0
      %590 = vmatmul.mubr.f32.gmra.mxu0 %v523
      %v591 = vpop.f32.mrf.mxu0
      %v592 = vadd.f32 0.0, %v591
      %v593 = vpop.f32.mrf.mxu0
      %v594 = vadd.f32 0.0, %v593
      %595 = vdwg.mxu0
      %596 = vmatprep.subr.mxu0 0.0
      %597 = vmatpush1.msra.mxu0 0.0
      %598 = vmatprep.subr.mxu0 0.0
      %599 = vmatpush1.msra.mxu0 0.0
      %600 = vmatprep.subr.mxu0 0.0
      %601 = vmatpush1.msra.mxu0 0.0
      %602 = vmatprep.subr.mxu0 0.0
      %603 = vmatpush1.msra.mxu0 0.0
      %604 = vmatprep.subr.mxu0 0.0
      %605 = vmatpush1.msra.mxu0 0.0
      %606 = vmatprep.subr.mxu0 0.0
      %607 = vmatpush1.msra.mxu0 0.0
      %608 = vmatprep.subr.mxu0 0.0
      %609 = vmatpush1.msra.mxu0 0.0
      %610 = vmatprep.subr.mxu0 0.0
      %611 = vmatpush1.msra.mxu0 %v520
      %612 = vmatprep.subr.mxu0 0.0
      %613 = vmatpush1.msra.mxu0 %v517
      %614 = vmatprep.subr.mxu0 0.0
      %615 = vmatpush1.msra.mxu0 %v514
      %616 = vmatprep.subr.mxu0 0.0
      %617 = vmatpush1.msra.mxu0 %v511
      %618 = vmatprep.subr.mxu0 0.0
      %619 = vmatpush1.msra.mxu0 %v508
      %620 = vmatprep.subr.mxu0 0.0
      %621 = vmatpush1.msra.mxu0 %v505
      %622 = vmatprep.subr.mxu0 0.0
      %623 = vmatpush1.msra.mxu0 %v502
      %624 = vmatprep.subr.mxu0 0.0
      %625 = vmatpush1.msra.mxu0 %v499
      %626 = vmatprep.subr.mxu0 0.0
      %627 = vmatpush1.msra.mxu0 %v496
      %628 = vmatprep.subr.mxu0 0.0
      %629 = vmatpush2.msra.mxu0 0.0
      %630 = vmatprep.subr.mxu0 0.0
      %631 = vmatpush2.msra.mxu0 0.0
      %632 = vmatprep.subr.mxu0 0.0
      %633 = vmatpush2.msra.mxu0 0.0
      %634 = vmatprep.subr.mxu0 0.0
      %635 = vmatpush2.msra.mxu0 0.0
      %636 = vmatprep.subr.mxu0 0.0
      %637 = vmatpush2.msra.mxu0 0.0
      %638 = vmatprep.subr.mxu0 0.0
      %639 = vmatpush2.msra.mxu0 0.0
      %640 = vmatprep.subr.mxu0 0.0
      %641 = vmatpush2.msra.mxu0 0.0
      %642 = vmatprep.subr.mxu0 0.0
      %643 = vmatpush2.msra.mxu0 0.0
      %644 = vmatprep.subr.mxu0 0.0
      %645 = vmatpush2.msra.mxu0 0.0
      %646 = vmatprep.subr.mxu0 0.0
      %647 = vmatpush2.msra.mxu0 0.0
      %648 = vmatprep.subr.mxu0 0.0
      %649 = vmatpush2.msra.mxu0 0.0
      %650 = vmatprep.subr.mxu0 0.0
      %651 = vmatpush2.msra.mxu0 0.0
      %652 = vmatprep.subr.mxu0 0.0
      %653 = vmatpush2.msra.mxu0 0.0
      %654 = vmatprep.subr.mxu0 0.0
      %655 = vmatpush2.msra.mxu0 0.0
      %656 = vmatprep.subr.mxu0 0.0
      %657 = vmatpush2.msra.mxu0 0.0
      %658 = vmatprep.subr.mxu0 0.0
      %659 = vmatpush2.msra.mxu0 0.0
      %660 = vmatprep.mubr.f32.mxu0 0.0
      %661 = vmatmul.mubr.f32.gmra.mxu0 %v523
      %v662 = vpop.f32.mrf.mxu0
      %v663 = vadd.f32 0.0, %v662
      %v664 = vpop.f32.mrf.mxu0
      %665 = vdwg.mxu0
      %666 = vst [vmem:[%s276] sm:$0xff] 0.0
      %667 = vst [vmem:[%s276 + $0x8] sm:$0xff] %v592
      %668 = vst [vmem:[%s276 + $0x10] sm:$0xff] %v594
      %669 = vst [vmem:[%s276 + $0x18] sm:$0xff] %v663
      %v670 = vld [vmem:[%s4] sm:$0x7]
      %v672 = vlaneseq
      %v673 = vshrl.u32 %v672, 7
      %v674 = vsub.s32 0, %v673
      %v675 = vrot.slane %v670, %v674
      %v676 = vlaneseq
      %v677 = vshrl.u32 %v676, 7
      %v678 = vsub.s32 1, %v677
      %v679 = vrot.slane %v670, %v678
      %v680 = vlaneseq
      %v681 = vshrl.u32 %v680, 7
      %v682 = vsub.s32 2, %v681
      %v683 = vrot.slane %v670, %v682
      %v687 = vmul.f32 %v592, %v675
      %v688 = vmul.f32 %v594, %v679
      %v689 = vmul.f32 %v663, %v683
      %v690 = vadd.f32 %v687, %v688
      %v691 = vadd.f32 %v690, %v689
      %692 = vadd.xlane.f32.xlu0 %v691
      %v693 = vpop.xlane.xlu0 %692
      %v694 = vmul.f32 %v687, %v592
      %v695 = vmul.f32 %v688, %v594
      %v696 = vmul.f32 %v689, %v663
      %v697 = vadd.f32 %v694, %v695
      %v698 = vadd.f32 %v697, %v696
      %699 = vadd.xlane.f32.xlu0 %v698
      %v700 = vpop.xlane.xlu0 %699
      %v701 = vsel %vm407, %v693, %v700
      %p702 = scmp.eq.s32.totalorder %s19, 0
      // Predicated region
      $region45: #{double_conv2d.4} parent=43 // pred_check
        %p703 = pneg %p702
      $region46: #{double_conv2d.4} parent=43 // pred_check_branch
        %705 = sbr.rel (%p703) target = $region48
      $region47: #{double_conv2d.4} parent=43 // pred_region
        %vm706 = vcmask 15360
        %707 = vst.msk [vmem:[%s7] sm:$0xff] %vm706, 0.0
      $region48: #{double_conv2d.4} parent=43 // pred_fallthru
        _
      %v708 = vld [vmem:[%s7] sm:$0xff]
      %v709 = vadd.f32 %v708, %v701
      %vm710 = vcmask 15360
      %711 = vst.msk [vmem:[%s7] sm:$0xff] %vm710, %v709
      %p712 = scmp.lt.s32.totalorder %s19, 1
      %s713 = scalar_select %p712, %s19, 1
      %s714 = smul.addr %s713, 4
      %s715 = smul.addr %s714, 8
      %s716 = scalar_lea.vmem %s6, %s715
      // Predicated region
      $region49: #{double_conv2d.4} parent=43 // pred_check
        %p717 = pneg %p168
      $region50: #{double_conv2d.4} parent=43 // pred_check_branch
        %719 = sbr.rel (%p717) target = $region52
      $region51: #{double_conv2d.4} parent=43 // pred_region
        _
      $region52: #{double_conv2d.4} parent=43 // pred_fallthru
        _
      // Predicated region
      $region53: #{double_conv2d.4} parent=43 // pred_check
        %p720 = pneg %p189
      $region54: #{double_conv2d.4} parent=43 // pred_check_branch
        %722 = sbr.rel (%p720) target = $region56
      $region55: #{double_conv2d.4} parent=43 // pred_region
        _
      $region56: #{double_conv2d.4} parent=43 // pred_fallthru
        _
      // Predicated region
      $region57: #{double_conv2d.4} parent=43 // pred_check
        %p723 = pneg %p189
      $region58: #{double_conv2d.4} parent=43 // pred_check_branch
        %725 = sbr.rel (%p723) target = $region60
      $region59: #{double_conv2d.4} parent=43 // pred_region
        _
      $region60: #{double_conv2d.4} parent=43 // pred_fallthru
        _
    $region44: #{double_conv2d.4} parent=5 // pred_fallthru
      _
    %p726 = scmp.le.s32.totalorder 2, %s14
    // Predicated region
    $region61: #{double_conv2d.4} parent=5 // pred_check
      %p727 = pneg %p726
    $region62: #{double_conv2d.4} parent=5 // pred_check_branch
      %729 = sbr.rel (%p727) target = $region64
    $region63: #{double_conv2d.4} parent=5 // pred_region
      %s730 = ssub.s32 %s14, 2
      // Predicated region
      $region65: #{double_conv2d.4} parent=63 // pred_check
        %p731 = pneg %p174
      $region66: #{double_conv2d.4} parent=63 // pred_check_branch
        %733 = sbr.rel (%p731) target = $region68
      $region67: #{double_conv2d.4} parent=63 // pred_region
        %p734 = scmp.lt.s32.totalorder %s20, 1
        %s735 = scalar_select %p734, %s20, 1
        %s736 = smul.addr %s735, 4
        %s737 = smul.addr %s736, 8
        %s738 = scalar_lea.vmem %s6, %s737
      $region68: #{double_conv2d.4} parent=63 // pred_fallthru
        _
    $region64: #{double_conv2d.4} parent=5 // pred_fallthru
      _
  $region6: #{double_conv2d.4} parent=0 // loop_footer
    %s18 = sadd.s32 1, %s14
  $region7: #{double_conv2d.4} parent=0 // loop_footer_branch
    %13 = sbr.rel target = $region3
  $region8: #{double_conv2d.4} parent=0 // loop_exit
    _

</llo_original>
